<compile_context>
chip_gen: v6e
topology: v6e:2x2x1
jax: 0.10.0
libtpu: 0.0.40
codegen_flags: <defaults>
</compile_context>

<pallas_src>
import math

import jax
import jax.numpy as jnp
from jax.experimental import pallas as pl
from jax.experimental.pallas import tpu as pltpu

EMBED = 64          # embedding_dim
NODE_DIM = 3        # node_dim
OPTION_DIM = 3      # option_dim
CONTEXT_DIM = 2     # context_dim
T = 3               # number of attention propagation rounds
FEAT_DIM = EMBED * (1 + CONTEXT_DIM + OPTION_DIM)   # 384


def _round_up(v, m):
    return ((v + m - 1) // m) * m


def _option_net_kernel(xT_ref, ctxT_ref, optT_ref, vecs_ref, w1t_ref, w2t_ref,
                       b3_ref, out_ref):
    # Block shapes: xT (3, N, Bt), ctxT (2, Bt), optT (3, Bt), vecs (E, 8),
    # w1t (E, 384) bf16, w2t (E, E) bf16, b3 (1,) in SMEM, out (1, Bt).
    _, n, bt = xT_ref.shape

    loc0 = xT_ref[0]                              # (N, Bt)
    loc1 = xT_ref[1]                              # (N, Bt)
    p = xT_ref[2]                                 # (N, Bt)

    # scores[j, i, b] = <loc[b,i], loc[b,j]> / sqrt(2)   (1/sqrt(2) folded in)
    inv_sqrt2 = 1.0 / math.sqrt(2.0)
    scores = (loc0[:, None, :] * loc0[None, :, :]
              + loc1[:, None, :] * loc1[None, :, :]) * inv_sqrt2      # (N, N, Bt)

    # softmax over the key axis (axis 0): elementwise max/sum across N slabs.
    m = jnp.max(scores, axis=0, keepdims=True)                        # (1, N, Bt)
    e = jnp.exp(scores - m)                                           # (N, N, Bt)
    inv_denom = 1.0 / jnp.sum(e, axis=0, keepdims=True)               # exact recip
    attn = e * inv_denom                                              # rows sum to 1

    # Rank-1 propagation: v = p*wv + bv and rows of attn sum to 1, so
    #   node_embedding = (attn applied T times to p) * wv + bv   (exact math).
    pt = p                                                            # (N, Bt)
    for _ in range(T):
        pt = jnp.sum(attn * pt[:, None, :], axis=0)                   # (N, Bt)

    vecs = vecs_ref[...]                          # (E, 8): wv,bv,b1,b2,w3,oe0,oe1,oe2
    wv = vecs[:, 0:1]                             # (E, 1)
    bv = vecs[:, 1:2]
    b1 = vecs[:, 2:3]
    b2 = vecs[:, 3:4]
    w3 = vecs[:, 4:5]

    # graph embedding: mean over nodes (no clamp, per reference).
    chunks = [jnp.mean(pt, axis=0, keepdims=True) * wv + bv]          # (E, Bt)

    # context embedding: one-hot gather over the node (sublane) axis, clamp(0).
    node_ids = jax.lax.broadcasted_iota(jnp.int32, (n, bt), 0)        # (N, Bt)
    ctx = ctxT_ref[...]                                               # (2, Bt) int32
    for j in range(CONTEXT_DIM):
        onehot = (node_ids == ctx[j:j + 1, :]).astype(jnp.float32)    # (N, Bt)
        s = jnp.sum(onehot * pt, axis=0, keepdims=True)               # (1, Bt)
        chunks.append(jnp.maximum(s * wv + bv, 0.0))                  # (E, Bt)

    # option embedding: option[:, j] * option_embed[j], clamp(0).
    opt = optT_ref[...]                                               # (3, Bt)
    for j in range(OPTION_DIM):
        chunks.append(jnp.maximum(opt[j:j + 1, :] * vecs[:, 5 + j:6 + j], 0.0))

    # feat^T: sublane concat, offsets 0,64,...  -> (384, Bt), same order as ref.
    feat = jnp.concatenate(chunks, axis=0)                            # (384, Bt)

    # MLP transposed: bf16 MXU operands, f32 accumulation, batch on MXU N dim.
    h1 = jnp.maximum(
        jnp.dot(w1t_ref[...], feat.astype(jnp.bfloat16),
                preferred_element_type=jnp.float32) + b1, 0.0)        # (E, Bt)
    h2 = jnp.maximum(
        jnp.dot(w2t_ref[...], h1.astype(jnp.bfloat16),
                preferred_element_type=jnp.float32) + b2, 0.0)        # (E, Bt)

    # fc3 (64 -> 1): sublane mul + reduce, already lane-dense (1, Bt).
    out_ref[...] = jnp.sum(h2 * w3, axis=0, keepdims=True) + b3_ref[0]


def option_network_forward(params, x, option, context_idx, *, block_b=None):
    """x: (B, N, 3) f32; option: (B, 3) f32; context_idx: (B, 2) int node indices."""
    wv, bv, oe, w1, b1, w2, b2, w3, b3 = params
    B, N, nd = x.shape
    assert nd == NODE_DIM

    # Batch tile: multiple of 128 (lane-dense stores).  For larger batches use
    # >= 2 tiles so both v7x TensorCores get work; cap the tile at 1024.
    if block_b is None:
        if B <= 256:
            block_b = max(128, _round_up(B, 128))
        else:
            block_b = min(1024, _round_up(pl.cdiv(B, 2), 128))
    block_b = max(128, _round_up(block_b, 128))
    B_pad = _round_up(B, block_b)
    G = B_pad // block_b
    pad = B_pad - B

    # Batch-last (lane-dense) input layouts.
    xT = jnp.transpose(jnp.asarray(x, jnp.float32), (2, 1, 0))        # (3, N, B)
    optT = jnp.transpose(jnp.asarray(option, jnp.float32))            # (3, B)
    # TODO(synk): PyTorch gather errors on out-of-range indices; we clamp instead.
    ctxT = jnp.transpose(jnp.clip(jnp.asarray(context_idx, jnp.int32), 0, N - 1))
    if pad:
        xT = jnp.pad(xT, ((0, 0), (0, 0), (0, pad)))
        optT = jnp.pad(optT, ((0, 0), (0, pad)))
        ctxT = jnp.pad(ctxT, ((0, 0), (0, pad)))

    # Pack all per-embedding vectors as lane columns of one (64, 8) array.
    vecs = jnp.stack(
        [wv.reshape(EMBED), bv.reshape(EMBED), b1.reshape(EMBED),
         b2.reshape(EMBED), w3.reshape(EMBED), oe[0], oe[1], oe[2]],
        axis=-1).astype(jnp.float32)                                  # (64, 8)
    w1t = jnp.asarray(w1.T, jnp.bfloat16)                             # (64, 384)
    w2t = jnp.asarray(w2.T, jnp.bfloat16)                             # (64, 64)
    b3s = jnp.asarray(b3, jnp.float32).reshape(1)                     # SMEM scalar

    const2 = lambda g: (0, 0)
    in_specs = [
        pl.BlockSpec((NODE_DIM, N, block_b), lambda g: (0, 0, g)),    # x^T
        pl.BlockSpec((CONTEXT_DIM, block_b), lambda g: (0, g)),       # context idx^T
        pl.BlockSpec((OPTION_DIM, block_b), lambda g: (0, g)),        # option^T
        pl.BlockSpec((EMBED, 8), const2),                             # packed vectors
        pl.BlockSpec((EMBED, FEAT_DIM), const2),                      # fc1 W^T (bf16)
        pl.BlockSpec((EMBED, EMBED), const2),                         # fc2 W^T (bf16)
        pl.BlockSpec(memory_space=pltpu.MemorySpace.SMEM),            # fc3 bias
    ]
    out_spec = pl.BlockSpec((1, block_b), lambda g: (0, g))           # lane-dense

    out = pl.pallas_call(
        _option_net_kernel,
        out_shape=jax.ShapeDtypeStruct((1, B_pad), jnp.float32),
        grid=(G,),
        in_specs=in_specs,
        out_specs=out_spec,
        compiler_params=pltpu.CompilerParams(
            dimension_semantics=("parallel",),
            vmem_limit_bytes=32 * 1024 * 1024),
    )(xT, ctxT, optT, vecs, w1t, w2t, b3s)

    return out.reshape(B_pad)[:B].reshape(B, 1)


def init_params(key):
    """Deterministic uniform(-1/sqrt(fan), +1/sqrt(fan)) init (mirrors init_parameters)."""
    ks = jax.random.split(key, 9)

    def unif(k, shape, fan):
        s = 1.0 / math.sqrt(fan)
        return jax.random.uniform(k, shape, jnp.float32, -s, s)

    wv = unif(ks[0], (1, EMBED), 1)                              # W_V: in=1 -> EMBED
    bv = unif(ks[1], (1, EMBED), EMBED)
    oe = unif(ks[2], (OPTION_DIM, EMBED), EMBED)                 # option_embed
    w1 = unif(ks[3], (FEAT_DIM, EMBED), FEAT_DIM)                # fc1 (in, out)
    b1 = unif(ks[4], (1, EMBED), EMBED)
    w2 = unif(ks[5], (EMBED, EMBED), EMBED)                      # fc2
    b2 = unif(ks[6], (1, EMBED), EMBED)
    w3 = unif(ks[7], (EMBED, 1), EMBED)                          # fc3
    b3 = unif(ks[8], (1, 1), 1)
    return (wv, bv, oe, w1, b1, w2, b2, w3, b3)


def reference_forward(params, x, option, context_idx):
    """Pure-JAX (f32) mirror of the PyTorch forward, for verification."""
    wv, bv, oe, w1, b1, w2, b2, w3, b3 = params
    B = x.shape[0]
    loc, p = x[:, :, :2], x[:, :, 2:3]
    v = jnp.matmul(p, wv) + bv                                   # (B, N, E)
    scores = jnp.matmul(loc, jnp.swapaxes(loc, 1, 2)) / jnp.sqrt(jnp.float32(2.0))
    attn = jax.nn.softmax(scores, axis=-1)
    ne = jnp.matmul(attn, v)
    for _ in range(T - 1):
        ne = jnp.matmul(attn, ne)
    graph = jnp.mean(ne, axis=1)                                 # (B, E)
    opt_emb = jnp.maximum(option[:, :, None] * oe[None], 0.0).reshape(B, -1)
    idx = context_idx.astype(jnp.int32)[:, :, None]              # (B, 2, 1)
    ctx_emb = jnp.maximum(jnp.take_along_axis(ne, idx, axis=1), 0.0).reshape(B, -1)
    feat = jnp.concatenate([graph, ctx_emb, opt_emb], axis=-1)   # (B, 384)
    h = jnp.maximum(feat @ w1 + b1, 0.0)
    h = jnp.maximum(h @ w2 + b2, 0.0)
    return h @ w3 + b3                                           # (B, 1)


if __name__ == "__main__":
    key = jax.random.PRNGKey(0)
    kp, kx, ko, kc = jax.random.split(key, 4)

    # Small, module-consistent shapes.
    B, N = 2, 8
    params = init_params(kp)
    x = jax.random.normal(kx, (B, N, NODE_DIM), jnp.float32)
    option = jax.random.normal(ko, (B, OPTION_DIM), jnp.float32)
    context_idx = jax.random.randint(kc, (B, CONTEXT_DIM), 0, N).astype(jnp.int32)

    out = jax.block_until_ready(option_network_forward(params, x, option, context_idx))
    ref = reference_forward(params, x, option, context_idx)
    assert out.shape == (B, 1)
    if not bool(jnp.allclose(out, ref, atol=1e-2, rtol=2e-2)):
        raise AssertionError(f"kernel/reference mismatch (small):\n{out}\nvs\n{ref}")

    # Larger batch to exercise multi-tile grid + padding path.
    k2x, k2o, k2c = jax.random.split(jax.random.PRNGKey(1), 3)
    B2 = 300
    x2 = jax.random.normal(k2x, (B2, N, NODE_DIM), jnp.float32)
    opt2 = jax.random.normal(k2o, (B2, OPTION_DIM), jnp.float32)
    ctx2 = jax.random.randint(k2c, (B2, CONTEXT_DIM), 0, N).astype(jnp.int32)
    out2 = jax.block_until_ready(
        option_network_forward(params, x2, opt2, ctx2, block_b=128))
    ref2 = reference_forward(params, x2, opt2, ctx2)
    if not bool(jnp.allclose(out2, ref2, atol=1e-2, rtol=2e-2)):
        err = float(jnp.max(jnp.abs(out2 - ref2)))
        raise AssertionError(f"kernel/reference mismatch (batched), max abs err {err}")

    # Default block_b heuristic path (multi-tile for megacore).
    out3 = jax.block_until_ready(option_network_forward(params, x2, opt2, ctx2))
    if not bool(jnp.allclose(out3, ref2, atol=1e-2, rtol=2e-2)):
        err = float(jnp.max(jnp.abs(out3 - ref2)))
        raise AssertionError(f"kernel/reference mismatch (default tiles), max abs err {err}")

    print("KERNEL_OK")
</pallas_src>

<mosaic_0001>
module attributes {stable_mosaic.version = 11 : i64} {
  func.func @_option_net_kernel(%arg0: i32, %arg1: memref<3x8x128xf32, #tpu.memory_space<vmem>>, %arg2: memref<2x128xi32, #tpu.memory_space<vmem>>, %arg3: memref<3x128xf32, #tpu.memory_space<vmem>>, %arg4: memref<64x8xf32, #tpu.memory_space<vmem>>, %arg5: memref<64x384xbf16, #tpu.memory_space<vmem>>, %arg6: memref<64x64xbf16, #tpu.memory_space<vmem>>, %arg7: memref<1xf32, #tpu.memory_space<smem>>, %arg8: memref<1x128xf32, #tpu.memory_space<vmem>>) attributes {dimension_semantics = [#tpu.dimension_semantics<parallel>], iteration_bounds = array<i64: 1>, scalar_prefetch = 0 : i64, scratch_operands = 0 : i64, tpu.core_type = #tpu.core_type<tc>, window_params = [{transform_indices = @transform_0, window_bounds = array<i64: 3, 8, 128>}, {transform_indices = @transform_1, window_bounds = array<i64: 2, 128>}, {transform_indices = @transform_2, window_bounds = array<i64: 3, 128>}, {pipeline_mode = #tpu.pipeline_mode<synchronous>, transform_indices = @transform_3, window_bounds = array<i64: 64, 8>}, {pipeline_mode = #tpu.pipeline_mode<synchronous>, transform_indices = @transform_4, window_bounds = array<i64: 64, 384>}, {pipeline_mode = #tpu.pipeline_mode<synchronous>, transform_indices = @transform_5, window_bounds = array<i64: 64, 64>}, {transform_indices = @transform_6, window_bounds = array<i64: 1>}, {transform_indices = @transform_7, window_bounds = array<i64: 1, 128>}]} {
    %c0 = arith.constant 0 : index
    %c0_0 = arith.constant 0 : index
    %c0_1 = arith.constant 0 : index
    %0 = vector.load %arg1[%c0, %c0_0, %c0_1] : memref<3x8x128xf32, #tpu.memory_space<vmem>>, vector<1x8x128xf32>
    %1 = vector.shape_cast %0 : vector<1x8x128xf32> to vector<8x128xf32>
    %c1 = arith.constant 1 : index
    %c0_2 = arith.constant 0 : index
    %c0_3 = arith.constant 0 : index
    %2 = vector.load %arg1[%c1, %c0_2, %c0_3] : memref<3x8x128xf32, #tpu.memory_space<vmem>>, vector<1x8x128xf32>
    %3 = vector.shape_cast %2 : vector<1x8x128xf32> to vector<8x128xf32>
    %c2 = arith.constant 2 : index
    %c0_4 = arith.constant 0 : index
    %c0_5 = arith.constant 0 : index
    %4 = vector.load %arg1[%c2, %c0_4, %c0_5] : memref<3x8x128xf32, #tpu.memory_space<vmem>>, vector<1x8x128xf32>
    %5 = vector.shape_cast %4 : vector<1x8x128xf32> to vector<8x128xf32>
    %6 = vector.shape_cast %1 : vector<8x128xf32> to vector<8x1x128xf32>
    %7 = vector.shape_cast %1 : vector<8x128xf32> to vector<1x8x128xf32>
    %8 = vector.broadcast %6 : vector<8x1x128xf32> to vector<8x8x128xf32>
    %9 = vector.broadcast %7 : vector<1x8x128xf32> to vector<8x8x128xf32>
    %10 = arith.mulf %8, %9 : vector<8x8x128xf32>
    %11 = vector.shape_cast %3 : vector<8x128xf32> to vector<8x1x128xf32>
    %12 = vector.shape_cast %3 : vector<8x128xf32> to vector<1x8x128xf32>
    %13 = vector.broadcast %11 : vector<8x1x128xf32> to vector<8x8x128xf32>
    %14 = vector.broadcast %12 : vector<1x8x128xf32> to vector<8x8x128xf32>
    %15 = arith.mulf %13, %14 : vector<8x8x128xf32>
    %16 = arith.addf %10, %15 : vector<8x8x128xf32>
    %cst = arith.constant 0.707106769 : f32
    %17 = vector.broadcast %cst : f32 to vector<8x8x128xf32>
    %18 = arith.mulf %16, %17 : vector<8x8x128xf32>
    %cst_6 = arith.constant dense<0xFF800000> : vector<8x128xf32>
    %19 = vector.multi_reduction <maximumf>, %18, %cst_6 [0] : vector<8x8x128xf32> to vector<8x128xf32>
    %20 = vector.shape_cast %19 : vector<8x128xf32> to vector<1x8x128xf32>
    %21 = vector.broadcast %20 : vector<1x8x128xf32> to vector<8x8x128xf32>
    %22 = arith.subf %18, %21 : vector<8x8x128xf32>
    %23 = math.exp %22 : vector<8x8x128xf32>
    %cst_7 = arith.constant dense<0.000000e+00> : vector<8x128xf32>
    %24 = vector.multi_reduction <add>, %23, %cst_7 [0] : vector<8x8x128xf32> to vector<8x128xf32>
    %25 = vector.shape_cast %24 : vector<8x128xf32> to vector<1x8x128xf32>
    %cst_8 = arith.constant 1.000000e+00 : f32
    %26 = vector.broadcast %cst_8 : f32 to vector<1x8x128xf32>
    %27 = arith.divf %26, %25 : vector<1x8x128xf32>
    %28 = vector.broadcast %27 : vector<1x8x128xf32> to vector<8x8x128xf32>
    %29 = arith.mulf %23, %28 : vector<8x8x128xf32>
    %30 = vector.shape_cast %5 : vector<8x128xf32> to vector<8x1x128xf32>
    %31 = vector.broadcast %30 : vector<8x1x128xf32> to vector<8x8x128xf32>
    %32 = arith.mulf %29, %31 : vector<8x8x128xf32>
    %cst_9 = arith.constant dense<0.000000e+00> : vector<8x128xf32>
    %33 = vector.multi_reduction <add>, %32, %cst_9 [0] : vector<8x8x128xf32> to vector<8x128xf32>
    %34 = vector.shape_cast %33 : vector<8x128xf32> to vector<8x1x128xf32>
    %35 = vector.broadcast %34 : vector<8x1x128xf32> to vector<8x8x128xf32>
    %36 = arith.mulf %29, %35 : vector<8x8x128xf32>
    %cst_10 = arith.constant dense<0.000000e+00> : vector<8x128xf32>
    %37 = vector.multi_reduction <add>, %36, %cst_10 [0] : vector<8x8x128xf32> to vector<8x128xf32>
    %38 = vector.shape_cast %37 : vector<8x128xf32> to vector<8x1x128xf32>
    %39 = vector.broadcast %38 : vector<8x1x128xf32> to vector<8x8x128xf32>
    %40 = arith.mulf %29, %39 : vector<8x8x128xf32>
    %cst_11 = arith.constant dense<0.000000e+00> : vector<8x128xf32>
    %41 = vector.multi_reduction <add>, %40, %cst_11 [0] : vector<8x8x128xf32> to vector<8x128xf32>
    %c0_12 = arith.constant 0 : index
    %c0_13 = arith.constant 0 : index
    %42 = vector.load %arg4[%c0_12, %c0_13] : memref<64x8xf32, #tpu.memory_space<vmem>>, vector<64x8xf32>
    %43 = vector.extract_strided_slice %42 {offsets = [0, 0], sizes = [64, 1], strides = [1, 1]} : vector<64x8xf32> to vector<64x1xf32>
    %44 = vector.extract_strided_slice %42 {offsets = [0, 1], sizes = [64, 1], strides = [1, 1]} : vector<64x8xf32> to vector<64x1xf32>
    %45 = vector.extract_strided_slice %42 {offsets = [0, 2], sizes = [64, 1], strides = [1, 1]} : vector<64x8xf32> to vector<64x1xf32>
    %46 = vector.extract_strided_slice %42 {offsets = [0, 3], sizes = [64, 1], strides = [1, 1]} : vector<64x8xf32> to vector<64x1xf32>
    %47 = vector.extract_strided_slice %42 {offsets = [0, 4], sizes = [64, 1], strides = [1, 1]} : vector<64x8xf32> to vector<64x1xf32>
    %cst_14 = arith.constant dense<0.000000e+00> : vector<128xf32>
    %48 = vector.multi_reduction <add>, %41, %cst_14 [0] : vector<8x128xf32> to vector<128xf32>
    %49 = vector.shape_cast %48 : vector<128xf32> to vector<1x128xf32>
    %cst_15 = arith.constant 8.000000e+00 : f32
    %50 = vector.broadcast %cst_15 : f32 to vector<1x128xf32>
    %51 = arith.divf %49, %50 : vector<1x128xf32>
    %52 = vector.broadcast %51 : vector<1x128xf32> to vector<64x128xf32>
    %53 = vector.broadcast %43 : vector<64x1xf32> to vector<64x128xf32>
    %54 = arith.mulf %52, %53 : vector<64x128xf32>
    %55 = vector.broadcast %44 : vector<64x1xf32> to vector<64x128xf32>
    %56 = arith.addf %54, %55 : vector<64x128xf32>
    %57 = tpu.iota {dimensions = array<i32: 0>} : vector<8x128xi32>
    %c0_16 = arith.constant 0 : index
    %c0_17 = arith.constant 0 : index
    %58 = vector.load %arg2[%c0_16, %c0_17] : memref<2x128xi32, #tpu.memory_space<vmem>>, vector<2x128xi32>
    %59 = vector.extract_strided_slice %58 {offsets = [0, 0], sizes = [1, 128], strides = [1, 1]} : vector<2x128xi32> to vector<1x128xi32>
    %60 = vector.broadcast %59 : vector<1x128xi32> to vector<8x128xi32>
    %61 = arith.cmpi eq, %57, %60 : vector<8x128xi32>
    %62 = arith.extui %61 : vector<8x128xi1> to vector<8x128xi32>
    %63 = arith.sitofp %62 : vector<8x128xi32> to vector<8x128xf32>
    %64 = arith.mulf %63, %41 : vector<8x128xf32>
    %cst_18 = arith.constant dense<0.000000e+00> : vector<128xf32>
    %65 = vector.multi_reduction <add>, %64, %cst_18 [0] : vector<8x128xf32> to vector<128xf32>
    %66 = vector.shape_cast %65 : vector<128xf32> to vector<1x128xf32>
    %67 = vector.broadcast %66 : vector<1x128xf32> to vector<64x128xf32>
    %68 = vector.broadcast %43 : vector<64x1xf32> to vector<64x128xf32>
    %69 = arith.mulf %67, %68 : vector<64x128xf32>
    %70 = vector.broadcast %44 : vector<64x1xf32> to vector<64x128xf32>
    %71 = arith.addf %69, %70 : vector<64x128xf32>
    %cst_19 = arith.constant 0.000000e+00 : f32
    %72 = vector.broadcast %cst_19 : f32 to vector<64x128xf32>
    %73 = arith.maximumf %71, %72 : vector<64x128xf32>
    %74 = vector.extract_strided_slice %58 {offsets = [1, 0], sizes = [1, 128], strides = [1, 1]} : vector<2x128xi32> to vector<1x128xi32>
    %75 = vector.broadcast %74 : vector<1x128xi32> to vector<8x128xi32>
    %76 = arith.cmpi eq, %57, %75 : vector<8x128xi32>
    %77 = arith.extui %76 : vector<8x128xi1> to vector<8x128xi32>
    %78 = arith.sitofp %77 : vector<8x128xi32> to vector<8x128xf32>
    %79 = arith.mulf %78, %41 : vector<8x128xf32>
    %cst_20 = arith.constant dense<0.000000e+00> : vector<128xf32>
    %80 = vector.multi_reduction <add>, %79, %cst_20 [0] : vector<8x128xf32> to vector<128xf32>
    %81 = vector.shape_cast %80 : vector<128xf32> to vector<1x128xf32>
    %82 = vector.broadcast %81 : vector<1x128xf32> to vector<64x128xf32>
    %83 = vector.broadcast %43 : vector<64x1xf32> to vector<64x128xf32>
    %84 = arith.mulf %82, %83 : vector<64x128xf32>
    %85 = vector.broadcast %44 : vector<64x1xf32> to vector<64x128xf32>
    %86 = arith.addf %84, %85 : vector<64x128xf32>
    %cst_21 = arith.constant 0.000000e+00 : f32
    %87 = vector.broadcast %cst_21 : f32 to vector<64x128xf32>
    %88 = arith.maximumf %86, %87 : vector<64x128xf32>
    %c0_22 = arith.constant 0 : index
    %c0_23 = arith.constant 0 : index
    %89 = vector.load %arg3[%c0_22, %c0_23] : memref<3x128xf32, #tpu.memory_space<vmem>>, vector<3x128xf32>
    %90 = vector.extract_strided_slice %89 {offsets = [0, 0], sizes = [1, 128], strides = [1, 1]} : vector<3x128xf32> to vector<1x128xf32>
    %91 = vector.extract_strided_slice %42 {offsets = [0, 5], sizes = [64, 1], strides = [1, 1]} : vector<64x8xf32> to vector<64x1xf32>
    %92 = vector.broadcast %90 : vector<1x128xf32> to vector<64x128xf32>
    %93 = vector.broadcast %91 : vector<64x1xf32> to vector<64x128xf32>
    %94 = arith.mulf %92, %93 : vector<64x128xf32>
    %cst_24 = arith.constant 0.000000e+00 : f32
    %95 = vector.broadcast %cst_24 : f32 to vector<64x128xf32>
    %96 = arith.maximumf %94, %95 : vector<64x128xf32>
    %97 = vector.extract_strided_slice %89 {offsets = [1, 0], sizes = [1, 128], strides = [1, 1]} : vector<3x128xf32> to vector<1x128xf32>
    %98 = vector.extract_strided_slice %42 {offsets = [0, 6], sizes = [64, 1], strides = [1, 1]} : vector<64x8xf32> to vector<64x1xf32>
    %99 = vector.broadcast %97 : vector<1x128xf32> to vector<64x128xf32>
    %100 = vector.broadcast %98 : vector<64x1xf32> to vector<64x128xf32>
    %101 = arith.mulf %99, %100 : vector<64x128xf32>
    %cst_25 = arith.constant 0.000000e+00 : f32
    %102 = vector.broadcast %cst_25 : f32 to vector<64x128xf32>
    %103 = arith.maximumf %101, %102 : vector<64x128xf32>
    %104 = vector.extract_strided_slice %89 {offsets = [2, 0], sizes = [1, 128], strides = [1, 1]} : vector<3x128xf32> to vector<1x128xf32>
    %105 = vector.extract_strided_slice %42 {offsets = [0, 7], sizes = [64, 1], strides = [1, 1]} : vector<64x8xf32> to vector<64x1xf32>
    %106 = vector.broadcast %104 : vector<1x128xf32> to vector<64x128xf32>
    %107 = vector.broadcast %105 : vector<64x1xf32> to vector<64x128xf32>
    %108 = arith.mulf %106, %107 : vector<64x128xf32>
    %cst_26 = arith.constant 0.000000e+00 : f32
    %109 = vector.broadcast %cst_26 : f32 to vector<64x128xf32>
    %110 = arith.maximumf %108, %109 : vector<64x128xf32>
    %111 = tpu.concatenate %56, %73, %88, %96, %103, %110 in 0 : vector<64x128xf32>, vector<64x128xf32>, vector<64x128xf32>, vector<64x128xf32>, vector<64x128xf32>, vector<64x128xf32> -> vector<384x128xf32>
    %c0_27 = arith.constant 0 : index
    %c0_28 = arith.constant 0 : index
    %112 = vector.load %arg5[%c0_27, %c0_28] : memref<64x384xbf16, #tpu.memory_space<vmem>>, vector<64x384xbf16>
    %113 = arith.truncf %111 : vector<384x128xf32> to vector<384x128xbf16>
    %cst_29 = arith.constant dense<0.000000e+00> : vector<64x128xf32>
    %114 = tpu.matmul %112, %113, %cst_29 {dimension_numbers = #tpu.dot_dimension_numbers<[1], [0], [0], [1], [0, 0, 1, 1], [], []>} : vector<64x384xbf16>, vector<384x128xbf16>, vector<64x128xf32> -> vector<64x128xf32>
    %115 = vector.broadcast %45 : vector<64x1xf32> to vector<64x128xf32>
    %116 = arith.addf %114, %115 : vector<64x128xf32>
    %cst_30 = arith.constant 0.000000e+00 : f32
    %117 = vector.broadcast %cst_30 : f32 to vector<64x128xf32>
    %118 = arith.maximumf %116, %117 : vector<64x128xf32>
    %c0_31 = arith.constant 0 : index
    %c0_32 = arith.constant 0 : index
    %119 = vector.load %arg6[%c0_31, %c0_32] : memref<64x64xbf16, #tpu.memory_space<vmem>>, vector<64x64xbf16>
    %120 = arith.truncf %118 : vector<64x128xf32> to vector<64x128xbf16>
    %cst_33 = arith.constant dense<0.000000e+00> : vector<64x128xf32>
    %121 = tpu.matmul %119, %120, %cst_33 {dimension_numbers = #tpu.dot_dimension_numbers<[1], [0], [0], [1], [0, 0, 1, 1], [], []>} : vector<64x64xbf16>, vector<64x128xbf16>, vector<64x128xf32> -> vector<64x128xf32>
    %122 = vector.broadcast %46 : vector<64x1xf32> to vector<64x128xf32>
    %123 = arith.addf %121, %122 : vector<64x128xf32>
    %cst_34 = arith.constant 0.000000e+00 : f32
    %124 = vector.broadcast %cst_34 : f32 to vector<64x128xf32>
    %125 = arith.maximumf %123, %124 : vector<64x128xf32>
    %126 = vector.broadcast %47 : vector<64x1xf32> to vector<64x128xf32>
    %127 = arith.mulf %125, %126 : vector<64x128xf32>
    %cst_35 = arith.constant dense<0.000000e+00> : vector<128xf32>
    %128 = vector.multi_reduction <add>, %127, %cst_35 [0] : vector<64x128xf32> to vector<128xf32>
    %129 = vector.shape_cast %128 : vector<128xf32> to vector<1x128xf32>
    %c0_36 = arith.constant 0 : index
    %130 = memref.load %arg7[%c0_36] : memref<1xf32, #tpu.memory_space<smem>>
    %131 = vector.broadcast %130 : f32 to vector<1x128xf32>
    %132 = arith.addf %129, %131 : vector<1x128xf32>
    %c0_37 = arith.constant 0 : index
    %c0_38 = arith.constant 0 : index
    %133 = vector.load %arg8[%c0_37, %c0_38] : memref<1x128xf32, #tpu.memory_space<vmem>>, vector<1x128xf32>
    tpu.vector_store %arg8[%c0_37, %c0_38], %132 {strides = array<i32>} : memref<1x128xf32, #tpu.memory_space<vmem>>, vector<1x128xf32>,
    return
  }
  func.func @transform_0(%arg0: i32) -> (i32, i32, i32) {
    %c0_i32 = arith.constant 0 : i32
    %c0_i32_0 = arith.constant 0 : i32
    %c0_i32_1 = arith.constant 0 : i32
    return %c0_i32, %c0_i32_0, %arg0 : i32, i32, i32
  }
  func.func @transform_1(%arg0: i32) -> (i32, i32) {
    %c0_i32 = arith.constant 0 : i32
    %c0_i32_0 = arith.constant 0 : i32
    return %c0_i32, %arg0 : i32, i32
  }
  func.func @transform_2(%arg0: i32) -> (i32, i32) {
    %c0_i32 = arith.constant 0 : i32
    %c0_i32_0 = arith.constant 0 : i32
    return %c0_i32, %arg0 : i32, i32
  }
  func.func @transform_3(%arg0: i32) -> (i32, i32) {
    %c0_i32 = arith.constant 0 : i32
    %c0_i32_0 = arith.constant 0 : i32
    %c0_i32_1 = arith.constant 0 : i32
    return %c0_i32, %c0_i32_0 : i32, i32
  }
  func.func @transform_4(%arg0: i32) -> (i32, i32) {
    %c0_i32 = arith.constant 0 : i32
    %c0_i32_0 = arith.constant 0 : i32
    %c0_i32_1 = arith.constant 0 : i32
    return %c0_i32, %c0_i32_0 : i32, i32
  }
  func.func @transform_5(%arg0: i32) -> (i32, i32) {
    %c0_i32 = arith.constant 0 : i32
    %c0_i32_0 = arith.constant 0 : i32
    %c0_i32_1 = arith.constant 0 : i32
    return %c0_i32, %c0_i32_0 : i32, i32
  }
  func.func @transform_6(%arg0: i32) -> i32 {
    %c0_i32 = arith.constant 0 : i32
    %c0_i32_0 = arith.constant 0 : i32
    return %c0_i32 : i32
  }
  func.func @transform_7(%arg0: i32) -> (i32, i32) {
    %c0_i32 = arith.constant 0 : i32
    %c0_i32_0 = arith.constant 0 : i32
    return %c0_i32, %arg0 : i32, i32
  }
}

</mosaic_0001>

<llo_original>
// kernel: tpu_custom_call.1
$region0: #{tpu_custom_call.1}
  #allocation0 [shape = 'u32[]', space=smem, size = 0x4, offset = 0x4, fixed_abs, tag = 'smem constant byte address 0x4 - core index']
  #allocation1 [shape = 'u32[144,128]{1,0:T(1,128)}', space=vmem, size = 0x12000, scoped, tag = 'internal scratch']
  #allocation2 [shape = 'f32[1]{0:T(128)S(6)}', space=smem, size = 0x200, scoped, tag = 'scoped memory for tpu_custom_call.1']
  %s0 = inlined_call_operand.vmem [shape: f32[3,8,128], index: 0, kind: input, shape index: {}]
  %s1 = inlined_call_operand.vmem [shape: s32[2,128], index: 1, kind: input, shape index: {}]
  %s2 = inlined_call_operand.vmem [shape: f32[3,128], index: 2, kind: input, shape index: {}]
  %s3 = inlined_call_operand.vmem [shape: f32[64,8], index: 3, kind: input, shape index: {}]
  %s4 = inlined_call_operand.hbm [shape: bf16[64,384], index: 4, kind: input, shape index: {}]
  %s5 = inlined_call_operand.vmem [shape: bf16[64,64], index: 5, kind: input, shape index: {}]
  %s6 = inlined_call_operand.<no memory space> [shape: f32[1], index: 6, kind: input, shape index: {}]
  %s7 = inlined_call_operand.hbm [shape: f32[1,128], index: 7, kind: output, shape index: {}]
  %s8 = sld [smem:[#allocation0]]
  $region42: #{tpu_custom_call.1} parent=0
    _
  %s10 = ssub.s32 1, %s8
  %s11 = scalar_select 0, %s10, %s8
  %12 = sst [smem:[#allocation2]] %s6
  $region1: #{tpu_custom_call.1} parent=0
    #allocation3 [shape = 'u8[49152]{0}', space=vmem, size = 0xc000, scoped, tag = 'input window, operand 4, single buffered']
    #allocation4 [shape = 's32[1]{0}', space=sflag, size = 0x4, scoped, tag = 'scoped memory for tpu_custom_call.1']
    #allocation5 [shape = 's32[1]{0}', space=sflag, size = 0x4, scoped, tag = 'scoped memory for tpu_custom_call.1']
    #allocation6 [shape = 'u8[512]{0}', space=vmem, size = 0x400, scoped, tag = 'output window, operand 0, single buffered']
    %13 = vsyncpa [#allocation4], 0
    %14 = vsyncpa [#allocation5], 0
    // Predicated region
    $region2: #{tpu_custom_call.1} parent=1 // pred_check
      _
    $region3: #{tpu_custom_call.1} parent=1 // pred_check_branch
      %16 = sbr.rel (0) target = $region5
    $region4: #{tpu_custom_call.1} parent=1 // pred_region
      _
    $region5: #{tpu_custom_call.1} parent=1 // pred_fallthru
      _
    // Predicated region
    $region6: #{tpu_custom_call.1} parent=1 // pred_check
      _
    $region7: #{tpu_custom_call.1} parent=1 // pred_check_branch
      %18 = sbr.rel (0) target = $region9
    $region8: #{tpu_custom_call.1} parent=1 // pred_region
      _
    $region9: #{tpu_custom_call.1} parent=1 // pred_fallthru
      _
    // Predicated region
    $region10: #{tpu_custom_call.1} parent=1 // pred_check
      _
    $region11: #{tpu_custom_call.1} parent=1 // pred_check_branch
      %20 = sbr.rel (0) target = $region13
    $region12: #{tpu_custom_call.1} parent=1 // pred_region
      _
    $region13: #{tpu_custom_call.1} parent=1 // pred_fallthru
      _
    // Predicated region
    $region14: #{tpu_custom_call.1} parent=1 // pred_check
      _
    $region15: #{tpu_custom_call.1} parent=1 // pred_check_branch
      %22 = sbr.rel (0) target = $region17
    $region16: #{tpu_custom_call.1} parent=1 // pred_region
      _
    $region17: #{tpu_custom_call.1} parent=1 // pred_fallthru
      _
    // Predicated region
    $region18: #{tpu_custom_call.1} parent=1 // pred_check
      _
    $region19: #{tpu_custom_call.1} parent=1 // pred_check_branch
      %24 = sbr.rel (0) target = $region21
    $region20: #{tpu_custom_call.1} parent=1 // pred_region
      %s26 = ssub.s32 1536, 1536
      %27 = vsyncadd [#allocation4], %s26
      %s28 = sshll.u32 [#allocation3], 4
      %s29 = int_to_ptr.vmem [resolvable:$true] %s28
      %34 = dma.hbm_to_vmem [thread:$0]  %s4, 1536, %s29, [#allocation4], 192, 192, 12
    $region21: #{tpu_custom_call.1} parent=1 // pred_fallthru
      _
    // Predicated region
    $region22: #{tpu_custom_call.1} parent=1 // pred_check
      _
    $region23: #{tpu_custom_call.1} parent=1 // pred_check_branch
      %36 = sbr.rel (0) target = $region25
    $region24: #{tpu_custom_call.1} parent=1 // pred_region
      _
    $region25: #{tpu_custom_call.1} parent=1 // pred_fallthru
      _
    // Predicated region
    $region26: #{tpu_custom_call.1} parent=1 // pred_check
      _
    $region27: #{tpu_custom_call.1} parent=1 // pred_check_branch
      %38 = sbr.rel (0) target = $region29
    $region28: #{tpu_custom_call.1} parent=1 // pred_region
      _
    $region29: #{tpu_custom_call.1} parent=1 // pred_fallthru
      _
    // Predicated region
    $region30: #{tpu_custom_call.1} parent=1 // pred_check
      _
    $region31: #{tpu_custom_call.1} parent=1 // pred_check_branch
      %40 = sbr.rel (0) target = $region33
    $region32: #{tpu_custom_call.1} parent=1 // pred_region
      %41 = dma.done [#allocation4], 1536
    $region33: #{tpu_custom_call.1} parent=1 // pred_fallthru
      _
    %v43 = vld [vmem:[%s0] sm:$0xff]
    %s44 = scalar_lea.vmem %s0, 8
    %v45 = vld [vmem:[%s44] sm:$0xff]
    %s46 = scalar_lea.vmem %s0, 16
    %v47 = vld [vmem:[%s46] sm:$0xff]
    %v49 = vcombine.high %v43, %v43
    %v51 = vunpack.c.l.s4 1966171168
    %v52 = vunpack.c.0.s8 %v51
    %v53 = vlaneseq
    %v54 = vshrl.u32 %v53, 7
    %v55 = vsub.s32 %v52, %v54
    %v56 = vrot.slane %v43, %v55
    %v58 = vunpack.c.l.s4 1966171168
    %v59 = vunpack.c.0.s8 %v58
    %v60 = vlaneseq
    %v61 = vshrl.u32 %v60, 7
    %v62 = vsub.s32 %v59, %v61
    %v63 = vrot.slane %v49, %v62
    %v64 = vcombine.high %v56, %v56
    %v65 = vcombine.high %v63, %v63
    %v67 = vunpack.c.l.s4 1966171168
    %v68 = vunpack.c.0.s8 %v67
    %v69 = vlaneseq
    %v70 = vshrl.u32 %v69, 7
    %v71 = vsub.s32 %v68, %v70
    %v72 = vrot.slane %v56, %v71
    %v74 = vunpack.c.l.s4 1966171168
    %v75 = vunpack.c.0.s8 %v74
    %v76 = vlaneseq
    %v77 = vshrl.u32 %v76, 7
    %v78 = vsub.s32 %v75, %v77
    %v79 = vrot.slane %v63, %v78
    %v81 = vunpack.c.l.s4 1966171168
    %v82 = vunpack.c.0.s8 %v81
    %v83 = vlaneseq
    %v84 = vshrl.u32 %v83, 7
    %v85 = vsub.s32 %v82, %v84
    %v86 = vrot.slane %v64, %v85
    %v88 = vunpack.c.l.s4 1966171168
    %v89 = vunpack.c.0.s8 %v88
    %v90 = vlaneseq
    %v91 = vshrl.u32 %v90, 7
    %v92 = vsub.s32 %v89, %v91
    %v93 = vrot.slane %v65, %v92
    %v94 = vcombine.high %v72, %v72
    %v95 = vcombine.high %v79, %v79
    %v96 = vcombine.high %v86, %v86
    %v97 = vcombine.high %v93, %v93
    %v98 = vlaneseq
    %v99 = vshrl.u32 %v98, 7
    %v100 = vsub.s32 0, %v99
    %v101 = vrot.slane %v72, %v100
    %v102 = vlaneseq
    %v103 = vshrl.u32 %v102, 7
    %v104 = vsub.s32 0, %v103
    %v105 = vrot.slane %v86, %v104
    %v106 = vlaneseq
    %v107 = vshrl.u32 %v106, 7
    %v108 = vsub.s32 0, %v107
    %v109 = vrot.slane %v94, %v108
    %v110 = vlaneseq
    %v111 = vshrl.u32 %v110, 7
    %v112 = vsub.s32 0, %v111
    %v113 = vrot.slane %v96, %v112
    %v114 = vlaneseq
    %v115 = vshrl.u32 %v114, 7
    %v116 = vsub.s32 0, %v115
    %v117 = vrot.slane %v79, %v116
    %v118 = vlaneseq
    %v119 = vshrl.u32 %v118, 7
    %v120 = vsub.s32 0, %v119
    %v121 = vrot.slane %v93, %v120
    %v122 = vlaneseq
    %v123 = vshrl.u32 %v122, 7
    %v124 = vsub.s32 0, %v123
    %v125 = vrot.slane %v95, %v124
    %v126 = vlaneseq
    %v127 = vshrl.u32 %v126, 7
    %v128 = vsub.s32 0, %v127
    %v129 = vrot.slane %v97, %v128
    %v138 = vmul.f32 %v101, %v43
    %v139 = vmul.f32 %v105, %v43
    %v140 = vmul.f32 %v109, %v43
    %v141 = vmul.f32 %v113, %v43
    %v142 = vmul.f32 %v117, %v43
    %v143 = vmul.f32 %v121, %v43
    %v144 = vmul.f32 %v125, %v43
    %v145 = vmul.f32 %v129, %v43
    %v147 = vcombine.high %v45, %v45
    %v149 = vunpack.c.l.s4 1966171168
    %v150 = vunpack.c.0.s8 %v149
    %v151 = vlaneseq
    %v152 = vshrl.u32 %v151, 7
    %v153 = vsub.s32 %v150, %v152
    %v154 = vrot.slane %v45, %v153
    %v156 = vunpack.c.l.s4 1966171168
    %v157 = vunpack.c.0.s8 %v156
    %v158 = vlaneseq
    %v159 = vshrl.u32 %v158, 7
    %v160 = vsub.s32 %v157, %v159
    %v161 = vrot.slane %v147, %v160
    %v162 = vcombine.high %v154, %v154
    %v163 = vcombine.high %v161, %v161
    %v165 = vunpack.c.l.s4 1966171168
    %v166 = vunpack.c.0.s8 %v165
    %v167 = vlaneseq
    %v168 = vshrl.u32 %v167, 7
    %v169 = vsub.s32 %v166, %v168
    %v170 = vrot.slane %v154, %v169
    %v172 = vunpack.c.l.s4 1966171168
    %v173 = vunpack.c.0.s8 %v172
    %v174 = vlaneseq
    %v175 = vshrl.u32 %v174, 7
    %v176 = vsub.s32 %v173, %v175
    %v177 = vrot.slane %v161, %v176
    %v179 = vunpack.c.l.s4 1966171168
    %v180 = vunpack.c.0.s8 %v179
    %v181 = vlaneseq
    %v182 = vshrl.u32 %v181, 7
    %v183 = vsub.s32 %v180, %v182
    %v184 = vrot.slane %v162, %v183
    %v186 = vunpack.c.l.s4 1966171168
    %v187 = vunpack.c.0.s8 %v186
    %v188 = vlaneseq
    %v189 = vshrl.u32 %v188, 7
    %v190 = vsub.s32 %v187, %v189
    %v191 = vrot.slane %v163, %v190
    %v192 = vcombine.high %v170, %v170
    %v193 = vcombine.high %v177, %v177
    %v194 = vcombine.high %v184, %v184
    %v195 = vcombine.high %v191, %v191
    %v196 = vlaneseq
    %v197 = vshrl.u32 %v196, 7
    %v198 = vsub.s32 0, %v197
    %v199 = vrot.slane %v170, %v198
    %v200 = vlaneseq
    %v201 = vshrl.u32 %v200, 7
    %v202 = vsub.s32 0, %v201
    %v203 = vrot.slane %v184, %v202
    %v204 = vlaneseq
    %v205 = vshrl.u32 %v204, 7
    %v206 = vsub.s32 0, %v205
    %v207 = vrot.slane %v192, %v206
    %v208 = vlaneseq
    %v209 = vshrl.u32 %v208, 7
    %v210 = vsub.s32 0, %v209
    %v211 = vrot.slane %v194, %v210
    %v212 = vlaneseq
    %v213 = vshrl.u32 %v212, 7
    %v214 = vsub.s32 0, %v213
    %v215 = vrot.slane %v177, %v214
    %v216 = vlaneseq
    %v217 = vshrl.u32 %v216, 7
    %v218 = vsub.s32 0, %v217
    %v219 = vrot.slane %v191, %v218
    %v220 = vlaneseq
    %v221 = vshrl.u32 %v220, 7
    %v222 = vsub.s32 0, %v221
    %v223 = vrot.slane %v193, %v222
    %v224 = vlaneseq
    %v225 = vshrl.u32 %v224, 7
    %v226 = vsub.s32 0, %v225
    %v227 = vrot.slane %v195, %v226
    %v236 = vmul.f32 %v199, %v45
    %v237 = vmul.f32 %v203, %v45
    %v238 = vmul.f32 %v207, %v45
    %v239 = vmul.f32 %v211, %v45
    %v240 = vmul.f32 %v215, %v45
    %v241 = vmul.f32 %v219, %v45
    %v242 = vmul.f32 %v223, %v45
    %v243 = vmul.f32 %v227, %v45
    %v244 = vadd.f32 %v138, %v236
    %v245 = vadd.f32 %v139, %v237
    %v246 = vadd.f32 %v140, %v238
    %v247 = vadd.f32 %v141, %v239
    %v248 = vadd.f32 %v142, %v240
    %v249 = vadd.f32 %v143, %v241
    %v250 = vadd.f32 %v144, %v242
    %v251 = vadd.f32 %v145, %v243
    %v252 = vmul.f32 %v244, 0.70710677
    %v253 = vmul.f32 %v245, 0.70710677
    %v254 = vmul.f32 %v246, 0.70710677
    %v255 = vmul.f32 %v247, 0.70710677
    %v256 = vmul.f32 %v248, 0.70710677
    %v257 = vmul.f32 %v249, 0.70710677
    %v258 = vmul.f32 %v250, 0.70710677
    %v259 = vmul.f32 %v251, 0.70710677
    %v260 = vmax.f32 %v252, %v256
    %v261 = vmax.f32 %v253, %v257
    %v262 = vmax.f32 %v254, %v258
    %v263 = vmax.f32 %v255, %v259
    %v264 = vmax.f32 %v260, %v261
    %v265 = vmax.f32 %v262, %v263
    %v266 = vmax.f32 %v264, %v265
    %v267 = vsub.f32 %v252, %v266
    %v268 = vsub.f32 %v253, %v266
    %v269 = vsub.f32 %v254, %v266
    %v270 = vsub.f32 %v255, %v266
    %v271 = vsub.f32 %v256, %v266
    %v272 = vsub.f32 %v257, %v266
    %v273 = vsub.f32 %v258, %v266
    %v274 = vsub.f32 %v259, %v266
    %v275 = vmul.f32 %v267, 1.442695
    %v276 = vpow.pop %v275
    %v277 = vmul.f32 %v268, 1.442695
    %v278 = vpow.pop %v277
    %v279 = vmul.f32 %v269, 1.442695
    %v280 = vpow.pop %v279
    %v281 = vmul.f32 %v270, 1.442695
    %v282 = vpow.pop %v281
    %v283 = vmul.f32 %v271, 1.442695
    %v284 = vpow.pop %v283
    %v285 = vmul.f32 %v272, 1.442695
    %v286 = vpow.pop %v285
    %v287 = vmul.f32 %v273, 1.442695
    %v288 = vpow.pop %v287
    %v289 = vmul.f32 %v274, 1.442695
    %v290 = vpow.pop %v289
    %v291 = vadd.f32 %v276, %v278
    %v292 = vadd.f32 %v291, %v280
    %v293 = vadd.f32 %v292, %v282
    %v294 = vadd.f32 %v293, %v284
    %v295 = vadd.f32 %v294, %v286
    %v296 = vadd.f32 %v295, %v288
    %v297 = vadd.f32 %v296, %v290
    %v298 = vrcp.pop %v297
    %v299 = vmul.f32 1.0, %v298
    %v300 = vmul.f32 %v276, %v299
    %v301 = vmul.f32 %v278, %v299
    %v302 = vmul.f32 %v280, %v299
    %v303 = vmul.f32 %v282, %v299
    %v304 = vmul.f32 %v284, %v299
    %v305 = vmul.f32 %v286, %v299
    %v306 = vmul.f32 %v288, %v299
    %v307 = vmul.f32 %v290, %v299
    %v309 = vcombine.high %v47, %v47
    %v311 = vunpack.c.l.s4 1966171168
    %v312 = vunpack.c.0.s8 %v311
    %v313 = vlaneseq
    %v314 = vshrl.u32 %v313, 7
    %v315 = vsub.s32 %v312, %v314
    %v316 = vrot.slane %v47, %v315
    %v318 = vunpack.c.l.s4 1966171168
    %v319 = vunpack.c.0.s8 %v318
    %v320 = vlaneseq
    %v321 = vshrl.u32 %v320, 7
    %v322 = vsub.s32 %v319, %v321
    %v323 = vrot.slane %v309, %v322
    %v324 = vcombine.high %v316, %v316
    %v325 = vcombine.high %v323, %v323
    %v327 = vunpack.c.l.s4 1966171168
    %v328 = vunpack.c.0.s8 %v327
    %v329 = vlaneseq
    %v330 = vshrl.u32 %v329, 7
    %v331 = vsub.s32 %v328, %v330
    %v332 = vrot.slane %v316, %v331
    %v334 = vunpack.c.l.s4 1966171168
    %v335 = vunpack.c.0.s8 %v334
    %v336 = vlaneseq
    %v337 = vshrl.u32 %v336, 7
    %v338 = vsub.s32 %v335, %v337
    %v339 = vrot.slane %v323, %v338
    %v341 = vunpack.c.l.s4 1966171168
    %v342 = vunpack.c.0.s8 %v341
    %v343 = vlaneseq
    %v344 = vshrl.u32 %v343, 7
    %v345 = vsub.s32 %v342, %v344
    %v346 = vrot.slane %v324, %v345
    %v348 = vunpack.c.l.s4 1966171168
    %v349 = vunpack.c.0.s8 %v348
    %v350 = vlaneseq
    %v351 = vshrl.u32 %v350, 7
    %v352 = vsub.s32 %v349, %v351
    %v353 = vrot.slane %v325, %v352
    %v354 = vcombine.high %v332, %v332
    %v355 = vcombine.high %v339, %v339
    %v356 = vcombine.high %v346, %v346
    %v357 = vcombine.high %v353, %v353
    %v358 = vlaneseq
    %v359 = vshrl.u32 %v358, 7
    %v360 = vsub.s32 0, %v359
    %v361 = vrot.slane %v332, %v360
    %v362 = vlaneseq
    %v363 = vshrl.u32 %v362, 7
    %v364 = vsub.s32 0, %v363
    %v365 = vrot.slane %v346, %v364
    %v366 = vlaneseq
    %v367 = vshrl.u32 %v366, 7
    %v368 = vsub.s32 0, %v367
    %v369 = vrot.slane %v354, %v368
    %v370 = vlaneseq
    %v371 = vshrl.u32 %v370, 7
    %v372 = vsub.s32 0, %v371
    %v373 = vrot.slane %v356, %v372
    %v374 = vlaneseq
    %v375 = vshrl.u32 %v374, 7
    %v376 = vsub.s32 0, %v375
    %v377 = vrot.slane %v339, %v376
    %v378 = vlaneseq
    %v379 = vshrl.u32 %v378, 7
    %v380 = vsub.s32 0, %v379
    %v381 = vrot.slane %v353, %v380
    %v382 = vlaneseq
    %v383 = vshrl.u32 %v382, 7
    %v384 = vsub.s32 0, %v383
    %v385 = vrot.slane %v355, %v384
    %v386 = vlaneseq
    %v387 = vshrl.u32 %v386, 7
    %v388 = vsub.s32 0, %v387
    %v389 = vrot.slane %v357, %v388
    %v398 = vmul.f32 %v300, %v361
    %v399 = vmul.f32 %v301, %v365
    %v400 = vmul.f32 %v302, %v369
    %v401 = vmul.f32 %v303, %v373
    %v402 = vmul.f32 %v304, %v377
    %v403 = vmul.f32 %v305, %v381
    %v404 = vmul.f32 %v306, %v385
    %v405 = vmul.f32 %v307, %v389
    %v406 = vadd.f32 %v398, %v399
    %v407 = vadd.f32 %v406, %v400
    %v408 = vadd.f32 %v407, %v401
    %v409 = vadd.f32 %v408, %v402
    %v410 = vadd.f32 %v409, %v403
    %v411 = vadd.f32 %v410, %v404
    %v412 = vadd.f32 %v411, %v405
    %v414 = vcombine.high %v412, %v412
    %v416 = vunpack.c.l.s4 1966171168
    %v417 = vunpack.c.0.s8 %v416
    %v418 = vlaneseq
    %v419 = vshrl.u32 %v418, 7
    %v420 = vsub.s32 %v417, %v419
    %v421 = vrot.slane %v412, %v420
    %v423 = vunpack.c.l.s4 1966171168
    %v424 = vunpack.c.0.s8 %v423
    %v425 = vlaneseq
    %v426 = vshrl.u32 %v425, 7
    %v427 = vsub.s32 %v424, %v426
    %v428 = vrot.slane %v414, %v427
    %v429 = vcombine.high %v421, %v421
    %v430 = vcombine.high %v428, %v428
    %v432 = vunpack.c.l.s4 1966171168
    %v433 = vunpack.c.0.s8 %v432
    %v434 = vlaneseq
    %v435 = vshrl.u32 %v434, 7
    %v436 = vsub.s32 %v433, %v435
    %v437 = vrot.slane %v421, %v436
    %v439 = vunpack.c.l.s4 1966171168
    %v440 = vunpack.c.0.s8 %v439
    %v441 = vlaneseq
    %v442 = vshrl.u32 %v441, 7
    %v443 = vsub.s32 %v440, %v442
    %v444 = vrot.slane %v428, %v443
    %v446 = vunpack.c.l.s4 1966171168
    %v447 = vunpack.c.0.s8 %v446
    %v448 = vlaneseq
    %v449 = vshrl.u32 %v448, 7
    %v450 = vsub.s32 %v447, %v449
    %v451 = vrot.slane %v429, %v450
    %v453 = vunpack.c.l.s4 1966171168
    %v454 = vunpack.c.0.s8 %v453
    %v455 = vlaneseq
    %v456 = vshrl.u32 %v455, 7
    %v457 = vsub.s32 %v454, %v456
    %v458 = vrot.slane %v430, %v457
    %v459 = vcombine.high %v437, %v437
    %v460 = vcombine.high %v444, %v444
    %v461 = vcombine.high %v451, %v451
    %v462 = vcombine.high %v458, %v458
    %v463 = vlaneseq
    %v464 = vshrl.u32 %v463, 7
    %v465 = vsub.s32 0, %v464
    %v466 = vrot.slane %v437, %v465
    %v467 = vlaneseq
    %v468 = vshrl.u32 %v467, 7
    %v469 = vsub.s32 0, %v468
    %v470 = vrot.slane %v451, %v469
    %v471 = vlaneseq
    %v472 = vshrl.u32 %v471, 7
    %v473 = vsub.s32 0, %v472
    %v474 = vrot.slane %v459, %v473
    %v475 = vlaneseq
    %v476 = vshrl.u32 %v475, 7
    %v477 = vsub.s32 0, %v476
    %v478 = vrot.slane %v461, %v477
    %v479 = vlaneseq
    %v480 = vshrl.u32 %v479, 7
    %v481 = vsub.s32 0, %v480
    %v482 = vrot.slane %v444, %v481
    %v483 = vlaneseq
    %v484 = vshrl.u32 %v483, 7
    %v485 = vsub.s32 0, %v484
    %v486 = vrot.slane %v458, %v485
    %v487 = vlaneseq
    %v488 = vshrl.u32 %v487, 7
    %v489 = vsub.s32 0, %v488
    %v490 = vrot.slane %v460, %v489
    %v491 = vlaneseq
    %v492 = vshrl.u32 %v491, 7
    %v493 = vsub.s32 0, %v492
    %v494 = vrot.slane %v462, %v493
    %v503 = vmul.f32 %v300, %v466
    %v504 = vmul.f32 %v301, %v470
    %v505 = vmul.f32 %v302, %v474
    %v506 = vmul.f32 %v303, %v478
    %v507 = vmul.f32 %v304, %v482
    %v508 = vmul.f32 %v305, %v486
    %v509 = vmul.f32 %v306, %v490
    %v510 = vmul.f32 %v307, %v494
    %v511 = vadd.f32 %v503, %v504
    %v512 = vadd.f32 %v511, %v505
    %v513 = vadd.f32 %v512, %v506
    %v514 = vadd.f32 %v513, %v507
    %v515 = vadd.f32 %v514, %v508
    %v516 = vadd.f32 %v515, %v509
    %v517 = vadd.f32 %v516, %v510
    %v519 = vcombine.high %v517, %v517
    %v521 = vunpack.c.l.s4 1966171168
    %v522 = vunpack.c.0.s8 %v521
    %v523 = vlaneseq
    %v524 = vshrl.u32 %v523, 7
    %v525 = vsub.s32 %v522, %v524
    %v526 = vrot.slane %v517, %v525
    %v528 = vunpack.c.l.s4 1966171168
    %v529 = vunpack.c.0.s8 %v528
    %v530 = vlaneseq
    %v531 = vshrl.u32 %v530, 7
    %v532 = vsub.s32 %v529, %v531
    %v533 = vrot.slane %v519, %v532
    %v534 = vcombine.high %v526, %v526
    %v535 = vcombine.high %v533, %v533
    %v537 = vunpack.c.l.s4 1966171168
    %v538 = vunpack.c.0.s8 %v537
    %v539 = vlaneseq
    %v540 = vshrl.u32 %v539, 7
    %v541 = vsub.s32 %v538, %v540
    %v542 = vrot.slane %v526, %v541
    %v544 = vunpack.c.l.s4 1966171168
    %v545 = vunpack.c.0.s8 %v544
    %v546 = vlaneseq
    %v547 = vshrl.u32 %v546, 7
    %v548 = vsub.s32 %v545, %v547
    %v549 = vrot.slane %v533, %v548
    %v551 = vunpack.c.l.s4 1966171168
    %v552 = vunpack.c.0.s8 %v551
    %v553 = vlaneseq
    %v554 = vshrl.u32 %v553, 7
    %v555 = vsub.s32 %v552, %v554
    %v556 = vrot.slane %v534, %v555
    %v558 = vunpack.c.l.s4 1966171168
    %v559 = vunpack.c.0.s8 %v558
    %v560 = vlaneseq
    %v561 = vshrl.u32 %v560, 7
    %v562 = vsub.s32 %v559, %v561
    %v563 = vrot.slane %v535, %v562
    %v564 = vcombine.high %v542, %v542
    %v565 = vcombine.high %v549, %v549
    %v566 = vcombine.high %v556, %v556
    %v567 = vcombine.high %v563, %v563
    %v568 = vlaneseq
    %v569 = vshrl.u32 %v568, 7
    %v570 = vsub.s32 0, %v569
    %v571 = vrot.slane %v542, %v570
    %v572 = vlaneseq
    %v573 = vshrl.u32 %v572, 7
    %v574 = vsub.s32 0, %v573
    %v575 = vrot.slane %v556, %v574
    %v576 = vlaneseq
    %v577 = vshrl.u32 %v576, 7
    %v578 = vsub.s32 0, %v577
    %v579 = vrot.slane %v564, %v578
    %v580 = vlaneseq
    %v581 = vshrl.u32 %v580, 7
    %v582 = vsub.s32 0, %v581
    %v583 = vrot.slane %v566, %v582
    %v584 = vlaneseq
    %v585 = vshrl.u32 %v584, 7
    %v586 = vsub.s32 0, %v585
    %v587 = vrot.slane %v549, %v586
    %v588 = vlaneseq
    %v589 = vshrl.u32 %v588, 7
    %v590 = vsub.s32 0, %v589
    %v591 = vrot.slane %v563, %v590
    %v592 = vlaneseq
    %v593 = vshrl.u32 %v592, 7
    %v594 = vsub.s32 0, %v593
    %v595 = vrot.slane %v565, %v594
    %v596 = vlaneseq
    %v597 = vshrl.u32 %v596, 7
    %v598 = vsub.s32 0, %v597
    %v599 = vrot.slane %v567, %v598
    %v608 = vmul.f32 %v300, %v571
    %v609 = vmul.f32 %v301, %v575
    %v610 = vmul.f32 %v302, %v579
    %v611 = vmul.f32 %v303, %v583
    %v612 = vmul.f32 %v304, %v587
    %v613 = vmul.f32 %v305, %v591
    %v614 = vmul.f32 %v306, %v595
    %v615 = vmul.f32 %v307, %v599
    %v616 = vadd.f32 %v608, %v609
    %v617 = vadd.f32 %v616, %v610
    %v618 = vadd.f32 %v617, %v611
    %v619 = vadd.f32 %v618, %v612
    %v620 = vadd.f32 %v619, %v613
    %v621 = vadd.f32 %v620, %v614
    %v622 = vadd.f32 %v621, %v615
    %v623 = vld [vmem:[%s3] sm:$0xff]
    %v624 = vld [vmem:[%s3 + $0x8] sm:$0xff]
    %v625 = vld [vmem:[%s3 + $0x10] sm:$0xff]
    %v626 = vld [vmem:[%s3 + $0x18] sm:$0xff]
    %v627 = vld [vmem:[%s3 + $0x20] sm:$0xff]
    %v628 = vld [vmem:[%s3 + $0x28] sm:$0xff]
    %v629 = vld [vmem:[%s3 + $0x30] sm:$0xff]
    %v630 = vld [vmem:[%s3 + $0x38] sm:$0xff]
    %v631 = vrot.slane %v622, 4
    %v632 = vadd.f32 %v622, %v631
    %v633 = vrot.slane %v632, 2
    %v634 = vadd.f32 %v632, %v633
    %v635 = vrot.slane %v634, 1
    %v636 = vadd.f32 %v634, %v635
    %v637 = vrcp.pop 8.0
    %v638 = vmul.f32 %v636, %v637
    %640 = vset.pattern.permute.xlu0 0
    %641 = vperm.xlu0 %640, %v623
    %v642 = vpop.permute.xlu0 %641
    %645 = vset.pattern.permute.xlu0 0
    %646 = vperm.xlu0 %645, %v624
    %v647 = vpop.permute.xlu0 %646
    %650 = vset.pattern.permute.xlu0 0
    %651 = vperm.xlu0 %650, %v625
    %v652 = vpop.permute.xlu0 %651
    %655 = vset.pattern.permute.xlu0 0
    %656 = vperm.xlu0 %655, %v626
    %v657 = vpop.permute.xlu0 %656
    %660 = vset.pattern.permute.xlu0 0
    %661 = vperm.xlu0 %660, %v627
    %v662 = vpop.permute.xlu0 %661
    %665 = vset.pattern.permute.xlu0 0
    %666 = vperm.xlu0 %665, %v628
    %v667 = vpop.permute.xlu0 %666
    %670 = vset.pattern.permute.xlu0 0
    %671 = vperm.xlu0 %670, %v629
    %v672 = vpop.permute.xlu0 %671
    %675 = vset.pattern.permute.xlu0 0
    %676 = vperm.xlu0 %675, %v630
    %v677 = vpop.permute.xlu0 %676
    %v679 = vmul.f32 %v638, %v642
    %v680 = vmul.f32 %v638, %v647
    %v681 = vmul.f32 %v638, %v652
    %v682 = vmul.f32 %v638, %v657
    %v683 = vmul.f32 %v638, %v662
    %v684 = vmul.f32 %v638, %v667
    %v685 = vmul.f32 %v638, %v672
    %v686 = vmul.f32 %v638, %v677
    %687 = vset.pattern.permute.xlu0 1
    %688 = vperm.xlu0 %687, %v623
    %v689 = vpop.permute.xlu0 %688
    %691 = vset.pattern.permute.xlu0 1
    %692 = vperm.xlu0 %691, %v624
    %v693 = vpop.permute.xlu0 %692
    %695 = vset.pattern.permute.xlu0 1
    %696 = vperm.xlu0 %695, %v625
    %v697 = vpop.permute.xlu0 %696
    %699 = vset.pattern.permute.xlu0 1
    %700 = vperm.xlu0 %699, %v626
    %v701 = vpop.permute.xlu0 %700
    %703 = vset.pattern.permute.xlu0 1
    %704 = vperm.xlu0 %703, %v627
    %v705 = vpop.permute.xlu0 %704
    %707 = vset.pattern.permute.xlu0 1
    %708 = vperm.xlu0 %707, %v628
    %v709 = vpop.permute.xlu0 %708
    %711 = vset.pattern.permute.xlu0 1
    %712 = vperm.xlu0 %711, %v629
    %v713 = vpop.permute.xlu0 %712
    %715 = vset.pattern.permute.xlu0 1
    %716 = vperm.xlu0 %715, %v630
    %v717 = vpop.permute.xlu0 %716
    %v719 = vadd.f32 %v679, %v689
    %v720 = vadd.f32 %v680, %v693
    %v721 = vadd.f32 %v681, %v697
    %v722 = vadd.f32 %v682, %v701
    %v723 = vadd.f32 %v683, %v705
    %v724 = vadd.f32 %v684, %v709
    %v725 = vadd.f32 %v685, %v713
    %v726 = vadd.f32 %v686, %v717
    %v727 = vlaneseq
    %v728 = vshrl.u32 %v727, 7
    %v729 = vld [vmem:[%s1] sm:$0x3]
    %v730 = vlaneseq
    %v731 = vshrl.u32 %v730, 7
    %v732 = vsub.s32 0, %v731
    %v733 = vrot.slane %v729, %v732
    %vm734 = vcmp.eq.s32.totalorder %v728, %v733
    %v735 = vsel %vm734, 1, 0
    %v736 = vcvt.s32.f32 %v735
    %v737 = vmul.f32 %v736, %v622
    %v738 = vrot.slane %v737, 4
    %v739 = vadd.f32 %v737, %v738
    %v740 = vrot.slane %v739, 2
    %v741 = vadd.f32 %v739, %v740
    %v742 = vrot.slane %v741, 1
    %v743 = vadd.f32 %v741, %v742
    %v744 = vmul.f32 %v743, %v642
    %v745 = vmul.f32 %v743, %v647
    %v746 = vmul.f32 %v743, %v652
    %v747 = vmul.f32 %v743, %v657
    %v748 = vmul.f32 %v743, %v662
    %v749 = vmul.f32 %v743, %v667
    %v750 = vmul.f32 %v743, %v672
    %v751 = vmul.f32 %v743, %v677
    %v752 = vadd.f32 %v744, %v689
    %v753 = vadd.f32 %v745, %v693
    %v754 = vadd.f32 %v746, %v697
    %v755 = vadd.f32 %v747, %v701
    %v756 = vadd.f32 %v748, %v705
    %v757 = vadd.f32 %v749, %v709
    %v758 = vadd.f32 %v750, %v713
    %v759 = vadd.f32 %v751, %v717
    %v760 = vmax.f32 %v752, 0.0
    %v761 = vmax.f32 %v753, 0.0
    %v762 = vmax.f32 %v754, 0.0
    %v763 = vmax.f32 %v755, 0.0
    %v764 = vmax.f32 %v756, 0.0
    %v765 = vmax.f32 %v757, 0.0
    %v766 = vmax.f32 %v758, 0.0
    %v767 = vmax.f32 %v759, 0.0
    %v768 = vlaneseq
    %v769 = vshrl.u32 %v768, 7
    %v770 = vsub.s32 1, %v769
    %v771 = vrot.slane %v729, %v770
    %vm772 = vcmp.eq.s32.totalorder %v728, %v771
    %v773 = vsel %vm772, 1, 0
    %v774 = vcvt.s32.f32 %v773
    %v775 = vmul.f32 %v774, %v622
    %v776 = vrot.slane %v775, 4
    %v777 = vadd.f32 %v775, %v776
    %v778 = vrot.slane %v777, 2
    %v779 = vadd.f32 %v777, %v778
    %v780 = vrot.slane %v779, 1
    %v781 = vadd.f32 %v779, %v780
    %v782 = vmul.f32 %v781, %v642
    %v783 = vmul.f32 %v781, %v647
    %v784 = vmul.f32 %v781, %v652
    %v785 = vmul.f32 %v781, %v657
    %v786 = vmul.f32 %v781, %v662
    %v787 = vmul.f32 %v781, %v667
    %v788 = vmul.f32 %v781, %v672
    %v789 = vmul.f32 %v781, %v677
    %v790 = vadd.f32 %v782, %v689
    %v791 = vadd.f32 %v783, %v693
    %v792 = vadd.f32 %v784, %v697
    %v793 = vadd.f32 %v785, %v701
    %v794 = vadd.f32 %v786, %v705
    %v795 = vadd.f32 %v787, %v709
    %v796 = vadd.f32 %v788, %v713
    %v797 = vadd.f32 %v789, %v717
    %v798 = vmax.f32 %v790, 0.0
    %v799 = vmax.f32 %v791, 0.0
    %v800 = vmax.f32 %v792, 0.0
    %v801 = vmax.f32 %v793, 0.0
    %v802 = vmax.f32 %v794, 0.0
    %v803 = vmax.f32 %v795, 0.0
    %v804 = vmax.f32 %v796, 0.0
    %v805 = vmax.f32 %v797, 0.0
    %v806 = vld [vmem:[%s2] sm:$0x7]
    %v807 = vlaneseq
    %v808 = vshrl.u32 %v807, 7
    %v809 = vsub.s32 0, %v808
    %v810 = vrot.slane %v806, %v809
    %811 = vset.pattern.permute.xlu0 5
    %812 = vperm.xlu0 %811, %v623
    %v813 = vpop.permute.xlu0 %812
    %815 = vset.pattern.permute.xlu0 5
    %816 = vperm.xlu0 %815, %v624
    %v817 = vpop.permute.xlu0 %816
    %819 = vset.pattern.permute.xlu0 5
    %820 = vperm.xlu0 %819, %v625
    %v821 = vpop.permute.xlu0 %820
    %823 = vset.pattern.permute.xlu0 5
    %824 = vperm.xlu0 %823, %v626
    %v825 = vpop.permute.xlu0 %824
    %827 = vset.pattern.permute.xlu0 5
    %828 = vperm.xlu0 %827, %v627
    %v829 = vpop.permute.xlu0 %828
    %831 = vset.pattern.permute.xlu0 5
    %832 = vperm.xlu0 %831, %v628
    %v833 = vpop.permute.xlu0 %832
    %835 = vset.pattern.permute.xlu0 5
    %836 = vperm.xlu0 %835, %v629
    %v837 = vpop.permute.xlu0 %836
    %839 = vset.pattern.permute.xlu0 5
    %840 = vperm.xlu0 %839, %v630
    %v841 = vpop.permute.xlu0 %840
    %v843 = vmul.f32 %v810, %v813
    %v844 = vmul.f32 %v810, %v817
    %v845 = vmul.f32 %v810, %v821
    %v846 = vmul.f32 %v810, %v825
    %v847 = vmul.f32 %v810, %v829
    %v848 = vmul.f32 %v810, %v833
    %v849 = vmul.f32 %v810, %v837
    %v850 = vmul.f32 %v810, %v841
    %v851 = vmax.f32 %v843, 0.0
    %v852 = vmax.f32 %v844, 0.0
    %v853 = vmax.f32 %v845, 0.0
    %v854 = vmax.f32 %v846, 0.0
    %v855 = vmax.f32 %v847, 0.0
    %v856 = vmax.f32 %v848, 0.0
    %v857 = vmax.f32 %v849, 0.0
    %v858 = vmax.f32 %v850, 0.0
    %v859 = vlaneseq
    %v860 = vshrl.u32 %v859, 7
    %v861 = vsub.s32 1, %v860
    %v862 = vrot.slane %v806, %v861
    %863 = vset.pattern.permute.xlu0 6
    %864 = vperm.xlu0 %863, %v623
    %v865 = vpop.permute.xlu0 %864
    %867 = vset.pattern.permute.xlu0 6
    %868 = vperm.xlu0 %867, %v624
    %v869 = vpop.permute.xlu0 %868
    %871 = vset.pattern.permute.xlu0 6
    %872 = vperm.xlu0 %871, %v625
    %v873 = vpop.permute.xlu0 %872
    %875 = vset.pattern.permute.xlu0 6
    %876 = vperm.xlu0 %875, %v626
    %v877 = vpop.permute.xlu0 %876
    %879 = vset.pattern.permute.xlu0 6
    %880 = vperm.xlu0 %879, %v627
    %v881 = vpop.permute.xlu0 %880
    %883 = vset.pattern.permute.xlu0 6
    %884 = vperm.xlu0 %883, %v628
    %v885 = vpop.permute.xlu0 %884
    %887 = vset.pattern.permute.xlu0 6
    %888 = vperm.xlu0 %887, %v629
    %v889 = vpop.permute.xlu0 %888
    %891 = vset.pattern.permute.xlu0 6
    %892 = vperm.xlu0 %891, %v630
    %v893 = vpop.permute.xlu0 %892
    %v895 = vmul.f32 %v862, %v865
    %v896 = vmul.f32 %v862, %v869
    %v897 = vmul.f32 %v862, %v873
    %v898 = vmul.f32 %v862, %v877
    %v899 = vmul.f32 %v862, %v881
    %v900 = vmul.f32 %v862, %v885
    %v901 = vmul.f32 %v862, %v889
    %v902 = vmul.f32 %v862, %v893
    %v903 = vmax.f32 %v895, 0.0
    %v904 = vmax.f32 %v896, 0.0
    %v905 = vmax.f32 %v897, 0.0
    %v906 = vmax.f32 %v898, 0.0
    %v907 = vmax.f32 %v899, 0.0
    %v908 = vmax.f32 %v900, 0.0
    %v909 = vmax.f32 %v901, 0.0
    %v910 = vmax.f32 %v902, 0.0
    %v911 = vlaneseq
    %v912 = vshrl.u32 %v911, 7
    %v913 = vsub.s32 2, %v912
    %v914 = vrot.slane %v806, %v913
    %915 = vset.pattern.permute.xlu0 7
    %916 = vperm.xlu0 %915, %v623
    %v917 = vpop.permute.xlu0 %916
    %919 = vset.pattern.permute.xlu0 7
    %920 = vperm.xlu0 %919, %v624
    %v921 = vpop.permute.xlu0 %920
    %923 = vset.pattern.permute.xlu0 7
    %924 = vperm.xlu0 %923, %v625
    %v925 = vpop.permute.xlu0 %924
    %927 = vset.pattern.permute.xlu0 7
    %928 = vperm.xlu0 %927, %v626
    %v929 = vpop.permute.xlu0 %928
    %931 = vset.pattern.permute.xlu0 7
    %932 = vperm.xlu0 %931, %v627
    %v933 = vpop.permute.xlu0 %932
    %935 = vset.pattern.permute.xlu0 7
    %936 = vperm.xlu0 %935, %v628
    %v937 = vpop.permute.xlu0 %936
    %939 = vset.pattern.permute.xlu0 7
    %940 = vperm.xlu0 %939, %v629
    %v941 = vpop.permute.xlu0 %940
    %943 = vset.pattern.permute.xlu0 7
    %944 = vperm.xlu0 %943, %v630
    %v945 = vpop.permute.xlu0 %944
    %v947 = vmul.f32 %v914, %v917
    %v948 = vmul.f32 %v914, %v921
    %v949 = vmul.f32 %v914, %v925
    %v950 = vmul.f32 %v914, %v929
    %v951 = vmul.f32 %v914, %v933
    %v952 = vmul.f32 %v914, %v937
    %v953 = vmul.f32 %v914, %v941
    %v954 = vmul.f32 %v914, %v945
    %v955 = vmax.f32 %v947, 0.0
    %v956 = vmax.f32 %v948, 0.0
    %v957 = vmax.f32 %v949, 0.0
    %v958 = vmax.f32 %v950, 0.0
    %v959 = vmax.f32 %v951, 0.0
    %v960 = vmax.f32 %v952, 0.0
    %v961 = vmax.f32 %v953, 0.0
    %v962 = vmax.f32 %v954, 0.0
    %v963 = vld [vmem:[#allocation3] sm:$0xff]
    %v964 = vld [vmem:[#allocation3 + $0x8] sm:$0xf]
    %v965 = vld [vmem:[#allocation3 + $0xc] sm:$0xff]
    %v966 = vld [vmem:[#allocation3 + $0x14] sm:$0xf]
    %v967 = vld [vmem:[#allocation3 + $0x18] sm:$0xff]
    %v968 = vld [vmem:[#allocation3 + $0x20] sm:$0xf]
    %v969 = vld [vmem:[#allocation3 + $0x24] sm:$0xff]
    %v970 = vld [vmem:[#allocation3 + $0x2c] sm:$0xf]
    %v971 = vld [vmem:[#allocation3 + $0x30] sm:$0xff]
    %v972 = vld [vmem:[#allocation3 + $0x38] sm:$0xf]
    %v973 = vld [vmem:[#allocation3 + $0x3c] sm:$0xff]
    %v974 = vld [vmem:[#allocation3 + $0x44] sm:$0xf]
    %v975 = vld [vmem:[#allocation3 + $0x48] sm:$0xff]
    %v976 = vld [vmem:[#allocation3 + $0x50] sm:$0xf]
    %v977 = vld [vmem:[#allocation3 + $0x54] sm:$0xff]
    %v978 = vld [vmem:[#allocation3 + $0x5c] sm:$0xf]
    %v979 = vpack.c.bf16 %v720, %v719
    %v980 = vpack.c.bf16 %v722, %v721
    %v981 = vpack.c.bf16 %v724, %v723
    %v982 = vpack.c.bf16 %v726, %v725
    %v983 = vpack.c.bf16 %v761, %v760
    %v984 = vpack.c.bf16 %v763, %v762
    %v985 = vpack.c.bf16 %v765, %v764
    %v986 = vpack.c.bf16 %v767, %v766
    %v987 = vpack.c.bf16 %v799, %v798
    %v988 = vpack.c.bf16 %v801, %v800
    %v989 = vpack.c.bf16 %v803, %v802
    %v990 = vpack.c.bf16 %v805, %v804
    %v991 = vpack.c.bf16 %v852, %v851
    %v992 = vpack.c.bf16 %v854, %v853
    %v993 = vpack.c.bf16 %v856, %v855
    %v994 = vpack.c.bf16 %v858, %v857
    %v995 = vpack.c.bf16 %v904, %v903
    %v996 = vpack.c.bf16 %v906, %v905
    %v997 = vpack.c.bf16 %v908, %v907
    %v998 = vpack.c.bf16 %v910, %v909
    %v999 = vpack.c.bf16 %v956, %v955
    %v1000 = vpack.c.bf16 %v958, %v957
    %v1001 = vpack.c.bf16 %v960, %v959
    %v1002 = vpack.c.bf16 %v962, %v961
    %1003 = vset.pattern.permute.xlu0 2
    %1004 = vperm.xlu0 %1003, %v623
    %v1005 = vpop.permute.xlu0 %1004
    %1007 = vset.pattern.permute.xlu0 2
    %1008 = vperm.xlu0 %1007, %v624
    %v1009 = vpop.permute.xlu0 %1008
    %1011 = vset.pattern.permute.xlu0 2
    %1012 = vperm.xlu0 %1011, %v625
    %v1013 = vpop.permute.xlu0 %1012
    %1015 = vset.pattern.permute.xlu0 2
    %1016 = vperm.xlu0 %1015, %v626
    %v1017 = vpop.permute.xlu0 %1016
    %1019 = vset.pattern.permute.xlu0 2
    %1020 = vperm.xlu0 %1019, %v627
    %v1021 = vpop.permute.xlu0 %1020
    %1023 = vset.pattern.permute.xlu0 2
    %1024 = vperm.xlu0 %1023, %v628
    %v1025 = vpop.permute.xlu0 %1024
    %1027 = vset.pattern.permute.xlu0 2
    %1028 = vperm.xlu0 %1027, %v629
    %v1029 = vpop.permute.xlu0 %1028
    %1031 = vset.pattern.permute.xlu0 2
    %1032 = vperm.xlu0 %1031, %v630
    %v1033 = vpop.permute.xlu0 %1032
    %v1051 = vunpack.c.l.b16 %v963
    %v1052 = vunpack.c.h.b16 %v963
    %v1053 = vunpack.c.l.b16 %v964
    %v1054 = vunpack.c.l.b16 %v965
    %v1055 = vunpack.c.h.b16 %v965
    %v1056 = vunpack.c.l.b16 %v966
    %v1057 = vunpack.c.l.b16 %v967
    %v1058 = vunpack.c.h.b16 %v967
    %v1059 = vunpack.c.l.b16 %v968
    %v1060 = vunpack.c.l.b16 %v969
    %v1061 = vunpack.c.h.b16 %v969
    %v1062 = vunpack.c.l.b16 %v970
    %v1063 = vunpack.c.l.b16 %v971
    %v1064 = vunpack.c.h.b16 %v971
    %v1065 = vunpack.c.l.b16 %v972
    %v1066 = vunpack.c.l.b16 %v973
    %v1067 = vunpack.c.h.b16 %v973
    %v1068 = vunpack.c.l.b16 %v974
    %v1069 = vunpack.c.l.b16 %v975
    %v1070 = vunpack.c.h.b16 %v975
    %v1071 = vunpack.c.l.b16 %v976
    %v1072 = vunpack.c.l.b16 %v977
    %v1073 = vunpack.c.h.b16 %v977
    %v1074 = vunpack.c.l.b16 %v978
    %v1075 = vpack.c.b16 %v1054, %v1051
    %v1076 = vpack.c.b16 %v1055, %v1052
    %v1077 = vpack.c.b16 %v1056, %v1053
    %v1078 = vpack.c.b16 %v1060, %v1057
    %v1079 = vpack.c.b16 %v1061, %v1058
    %v1080 = vpack.c.b16 %v1062, %v1059
    %v1081 = vpack.c.b16 %v1066, %v1063
    %v1082 = vpack.c.b16 %v1067, %v1064
    %v1083 = vpack.c.b16 %v1068, %v1065
    %v1084 = vpack.c.b16 %v1072, %v1069
    %v1085 = vpack.c.b16 %v1073, %v1070
    %v1086 = vpack.c.b16 %v1074, %v1071
    %1099 = vmatprep.subr.bf16.mxu0 0
    %1100 = vmatpush1.bf16.msra.mxu0 %v986
    %1101 = vmatprep.subr.bf16.mxu0 0
    %1102 = vmatpush1.bf16.msra.mxu0 %v985
    %1103 = vmatprep.subr.bf16.mxu0 0
    %1104 = vmatpush1.bf16.msra.mxu0 %v984
    %1105 = vmatprep.subr.bf16.mxu0 0
    %1106 = vmatpush1.bf16.msra.mxu0 %v983
    %1107 = vmatprep.subr.bf16.mxu0 0
    %1108 = vmatpush1.bf16.msra.mxu0 %v982
    %1109 = vmatprep.subr.bf16.mxu0 0
    %1110 = vmatpush1.bf16.msra.mxu0 %v981
    %1111 = vmatprep.subr.bf16.mxu0 0
    %1112 = vmatpush1.bf16.msra.mxu0 %v980
    %1113 = vmatprep.subr.bf16.mxu0 0
    %1114 = vmatpush1.bf16.msra.mxu0 %v979
    %1115 = vmatprep.subr.bf16.mxu0 0
    %1116 = vmatpush2.bf16.msra.mxu0 %v994
    %1117 = vmatprep.subr.bf16.mxu0 0
    %1118 = vmatpush2.bf16.msra.mxu0 %v993
    %1119 = vmatprep.subr.bf16.mxu0 0
    %1120 = vmatpush2.bf16.msra.mxu0 %v992
    %1121 = vmatprep.subr.bf16.mxu0 0
    %1122 = vmatpush2.bf16.msra.mxu0 %v991
    %1123 = vmatprep.subr.bf16.mxu0 0
    %1124 = vmatpush2.bf16.msra.mxu0 %v990
    %1125 = vmatprep.subr.bf16.mxu0 0
    %1126 = vmatpush2.bf16.msra.mxu0 %v989
    %1127 = vmatprep.subr.bf16.mxu0 0
    %1128 = vmatpush2.bf16.msra.mxu0 %v988
    %1129 = vmatprep.subr.bf16.mxu0 0
    %1130 = vmatpush2.bf16.msra.mxu0 %v987
    %1131 = vmatprep.mubr.bf16.mxu0 %v1076
    %1132 = vmatmul.mubr.bf16.gmra.mxu0 %v1075
    %v1133 = vpop.f32.mrf.mxu0
    %v1134 = vadd.f32 %v1005, %v1133
    %v1135 = vpop.f32.mrf.mxu0
    %v1136 = vpop.f32.mrf.mxu0
    %v1137 = vadd.f32 %v1009, %v1136
    %v1138 = vpop.f32.mrf.mxu0
    %1139 = vmatprep.mubr.bf16.mxu0 %v1079
    %1140 = vmatmul.mubr.bf16.gmra.mxu0 %v1078
    %v1141 = vpop.f32.mrf.mxu0
    %v1142 = vadd.f32 %v1013, %v1141
    %v1143 = vpop.f32.mrf.mxu0
    %v1144 = vpop.f32.mrf.mxu0
    %v1145 = vadd.f32 %v1017, %v1144
    %v1146 = vpop.f32.mrf.mxu0
    %1147 = vmatprep.mubr.bf16.mxu0 %v1082
    %1148 = vmatmul.mubr.bf16.gmra.mxu0 %v1081
    %v1149 = vpop.f32.mrf.mxu0
    %v1150 = vadd.f32 %v1021, %v1149
    %v1151 = vpop.f32.mrf.mxu0
    %v1152 = vpop.f32.mrf.mxu0
    %v1153 = vadd.f32 %v1025, %v1152
    %v1154 = vpop.f32.mrf.mxu0
    %1155 = vmatprep.mubr.bf16.mxu0 %v1085
    %1156 = vmatmul.mubr.bf16.gmra.mxu0 %v1084
    %v1157 = vpop.f32.mrf.mxu0
    %v1158 = vadd.f32 %v1029, %v1157
    %v1159 = vpop.f32.mrf.mxu0
    %v1160 = vpop.f32.mrf.mxu0
    %v1161 = vadd.f32 %v1033, %v1160
    %v1162 = vpop.f32.mrf.mxu0
    %1163 = vdwg.mxu0
    %1164 = vmatprep.subr.bf16.mxu0 0
    %1165 = vmatpush1.bf16.msra.mxu0 %v1002
    %1166 = vmatprep.subr.bf16.mxu0 0
    %1167 = vmatpush1.bf16.msra.mxu0 %v1001
    %1168 = vmatprep.subr.bf16.mxu0 0
    %1169 = vmatpush1.bf16.msra.mxu0 %v1000
    %1170 = vmatprep.subr.bf16.mxu0 0
    %1171 = vmatpush1.bf16.msra.mxu0 %v999
    %1172 = vmatprep.subr.bf16.mxu0 0
    %1173 = vmatpush1.bf16.msra.mxu0 %v998
    %1174 = vmatprep.subr.bf16.mxu0 0
    %1175 = vmatpush1.bf16.msra.mxu0 %v997
    %1176 = vmatprep.subr.bf16.mxu0 0
    %1177 = vmatpush1.bf16.msra.mxu0 %v996
    %1178 = vmatprep.subr.bf16.mxu0 0
    %1179 = vmatpush1.bf16.msra.mxu0 %v995
    %1180 = vmatprep.subr.bf16.mxu0 0
    %1181 = vmatpush2.bf16.msra.mxu0 0
    %1182 = vmatprep.subr.bf16.mxu0 0
    %1183 = vmatpush2.bf16.msra.mxu0 0
    %1184 = vmatprep.subr.bf16.mxu0 0
    %1185 = vmatpush2.bf16.msra.mxu0 0
    %1186 = vmatprep.subr.bf16.mxu0 0
    %1187 = vmatpush2.bf16.msra.mxu0 0
    %1188 = vmatprep.subr.bf16.mxu0 0
    %1189 = vmatpush2.bf16.msra.mxu0 0
    %1190 = vmatprep.subr.bf16.mxu0 0
    %1191 = vmatpush2.bf16.msra.mxu0 0
    %1192 = vmatprep.subr.bf16.mxu0 0
    %1193 = vmatpush2.bf16.msra.mxu0 0
    %1194 = vmatprep.subr.bf16.mxu0 0
    %1195 = vmatpush2.bf16.msra.mxu0 0
    %1196 = vmatprep.mubr.bf16.mxu0 0
    %1197 = vmatmul.mubr.bf16.gmra.mxu0 %v1077
    %v1198 = vpop.f32.mrf.mxu0
    %v1199 = vadd.f32 %v1134, %v1198
    %v1200 = vpop.f32.mrf.mxu0
    %v1201 = vpop.f32.mrf.mxu0
    %v1202 = vadd.f32 %v1137, %v1201
    %v1203 = vpop.f32.mrf.mxu0
    %1204 = vmatprep.mubr.bf16.mxu0 0
    %1205 = vmatmul.mubr.bf16.gmra.mxu0 %v1080
    %v1206 = vpop.f32.mrf.mxu0
    %v1207 = vadd.f32 %v1142, %v1206
    %v1208 = vpop.f32.mrf.mxu0
    %v1209 = vpop.f32.mrf.mxu0
    %v1210 = vadd.f32 %v1145, %v1209
    %v1211 = vpop.f32.mrf.mxu0
    %1212 = vmatprep.mubr.bf16.mxu0 0
    %1213 = vmatmul.mubr.bf16.gmra.mxu0 %v1083
    %v1214 = vpop.f32.mrf.mxu0
    %v1215 = vadd.f32 %v1150, %v1214
    %v1216 = vpop.f32.mrf.mxu0
    %v1217 = vpop.f32.mrf.mxu0
    %v1218 = vadd.f32 %v1153, %v1217
    %v1219 = vpop.f32.mrf.mxu0
    %1220 = vmatprep.mubr.bf16.mxu0 0
    %1221 = vmatmul.mubr.bf16.gmra.mxu0 %v1086
    %v1222 = vpop.f32.mrf.mxu0
    %v1223 = vadd.f32 %v1158, %v1222
    %v1224 = vpop.f32.mrf.mxu0
    %v1225 = vpop.f32.mrf.mxu0
    %v1226 = vadd.f32 %v1161, %v1225
    %v1227 = vpop.f32.mrf.mxu0
    %1228 = vdwg.mxu0
    %v1229 = vmax.f32 %v1199, 0.0
    %v1230 = vmax.f32 %v1202, 0.0
    %v1231 = vmax.f32 %v1207, 0.0
    %v1232 = vmax.f32 %v1210, 0.0
    %v1233 = vmax.f32 %v1215, 0.0
    %v1234 = vmax.f32 %v1218, 0.0
    %v1235 = vmax.f32 %v1223, 0.0
    %v1236 = vmax.f32 %v1226, 0.0
    %v1237 = vld [vmem:[%s5] sm:$0xf]
    %v1238 = vld [vmem:[%s5 + $0x4] sm:$0xf]
    %v1239 = vld [vmem:[%s5 + $0x8] sm:$0xf]
    %v1240 = vld [vmem:[%s5 + $0xc] sm:$0xf]
    %v1241 = vld [vmem:[%s5 + $0x10] sm:$0xf]
    %v1242 = vld [vmem:[%s5 + $0x14] sm:$0xf]
    %v1243 = vld [vmem:[%s5 + $0x18] sm:$0xf]
    %v1244 = vld [vmem:[%s5 + $0x1c] sm:$0xf]
    %v1245 = vpack.c.bf16 %v1230, %v1229
    %v1246 = vpack.c.bf16 %v1232, %v1231
    %v1247 = vpack.c.bf16 %v1234, %v1233
    %v1248 = vpack.c.bf16 %v1236, %v1235
    %1249 = vset.pattern.permute.xlu0 3
    %1250 = vperm.xlu0 %1249, %v623
    %v1251 = vpop.permute.xlu0 %1250
    %1253 = vset.pattern.permute.xlu0 3
    %1254 = vperm.xlu0 %1253, %v624
    %v1255 = vpop.permute.xlu0 %1254
    %1257 = vset.pattern.permute.xlu0 3
    %1258 = vperm.xlu0 %1257, %v625
    %v1259 = vpop.permute.xlu0 %1258
    %1261 = vset.pattern.permute.xlu0 3
    %1262 = vperm.xlu0 %1261, %v626
    %v1263 = vpop.permute.xlu0 %1262
    %1265 = vset.pattern.permute.xlu0 3
    %1266 = vperm.xlu0 %1265, %v627
    %v1267 = vpop.permute.xlu0 %1266
    %1269 = vset.pattern.permute.xlu0 3
    %1270 = vperm.xlu0 %1269, %v628
    %v1271 = vpop.permute.xlu0 %1270
    %1273 = vset.pattern.permute.xlu0 3
    %1274 = vperm.xlu0 %1273, %v629
    %v1275 = vpop.permute.xlu0 %1274
    %1277 = vset.pattern.permute.xlu0 3
    %1278 = vperm.xlu0 %1277, %v630
    %v1279 = vpop.permute.xlu0 %1278
    %v1289 = vunpack.c.l.b16 %v1237
    %v1290 = vunpack.c.l.b16 %v1238
    %v1291 = vunpack.c.l.b16 %v1239
    %v1292 = vunpack.c.l.b16 %v1240
    %v1293 = vunpack.c.l.b16 %v1241
    %v1294 = vunpack.c.l.b16 %v1242
    %v1295 = vunpack.c.l.b16 %v1243
    %v1296 = vunpack.c.l.b16 %v1244
    %v1297 = vpack.c.b16 %v1290, %v1289
    %v1298 = vpack.c.b16 %v1292, %v1291
    %v1299 = vpack.c.b16 %v1294, %v1293
    %v1300 = vpack.c.b16 %v1296, %v1295
    %vm1301 = vcmask 523264
    %v1303 = vsel %vm1301, %v1297, 0
    %v1306 = vsel %vm1301, %v1298, 0
    %v1309 = vsel %vm1301, %v1299, 0
    %v1312 = vsel %vm1301, %v1300, 0
    %1314 = vmatprep.subr.bf16.mxu0 0
    %1315 = vmatpush1.bf16.msra.mxu0 0
    %1316 = vmatprep.subr.bf16.mxu0 0
    %1317 = vmatpush1.bf16.msra.mxu0 0
    %1318 = vmatprep.subr.bf16.mxu0 0
    %1319 = vmatpush1.bf16.msra.mxu0 0
    %1320 = vmatprep.subr.bf16.mxu0 0
    %1321 = vmatpush1.bf16.msra.mxu0 0
    %1322 = vmatprep.subr.bf16.mxu0 0
    %1323 = vmatpush1.bf16.msra.mxu0 %v1248
    %1324 = vmatprep.subr.bf16.mxu0 0
    %1325 = vmatpush1.bf16.msra.mxu0 %v1247
    %1326 = vmatprep.subr.bf16.mxu0 0
    %1327 = vmatpush1.bf16.msra.mxu0 %v1246
    %1328 = vmatprep.subr.bf16.mxu0 0
    %1329 = vmatpush1.bf16.msra.mxu0 %v1245
    %1330 = vmatprep.subr.bf16.mxu0 0
    %1331 = vmatpush2.bf16.msra.mxu0 0
    %1332 = vmatprep.subr.bf16.mxu0 0
    %1333 = vmatpush2.bf16.msra.mxu0 0
    %1334 = vmatprep.subr.bf16.mxu0 0
    %1335 = vmatpush2.bf16.msra.mxu0 0
    %1336 = vmatprep.subr.bf16.mxu0 0
    %1337 = vmatpush2.bf16.msra.mxu0 0
    %1338 = vmatprep.subr.bf16.mxu0 0
    %1339 = vmatpush2.bf16.msra.mxu0 0
    %1340 = vmatprep.subr.bf16.mxu0 0
    %1341 = vmatpush2.bf16.msra.mxu0 0
    %1342 = vmatprep.subr.bf16.mxu0 0
    %1343 = vmatpush2.bf16.msra.mxu0 0
    %1344 = vmatprep.subr.bf16.mxu0 0
    %1345 = vmatpush2.bf16.msra.mxu0 0
    %1346 = vmatprep.mubr.bf16.mxu0 0
    %1347 = vmatmul.mubr.bf16.gmra.mxu0 %v1303
    %v1348 = vpop.f32.mrf.mxu0
    %v1349 = vadd.f32 %v1251, %v1348
    %v1350 = vpop.f32.mrf.mxu0
    %v1351 = vpop.f32.mrf.mxu0
    %v1352 = vadd.f32 %v1255, %v1351
    %v1353 = vpop.f32.mrf.mxu0
    %1354 = vmatprep.mubr.bf16.mxu0 0
    %1355 = vmatmul.mubr.bf16.gmra.mxu0 %v1306
    %v1356 = vpop.f32.mrf.mxu0
    %v1357 = vadd.f32 %v1259, %v1356
    %v1358 = vpop.f32.mrf.mxu0
    %v1359 = vpop.f32.mrf.mxu0
    %v1360 = vadd.f32 %v1263, %v1359
    %v1361 = vpop.f32.mrf.mxu0
    %1362 = vmatprep.mubr.bf16.mxu0 0
    %1363 = vmatmul.mubr.bf16.gmra.mxu0 %v1309
    %v1364 = vpop.f32.mrf.mxu0
    %v1365 = vadd.f32 %v1267, %v1364
    %v1366 = vpop.f32.mrf.mxu0
    %v1367 = vpop.f32.mrf.mxu0
    %v1368 = vadd.f32 %v1271, %v1367
    %v1369 = vpop.f32.mrf.mxu0
    %1370 = vmatprep.mubr.bf16.mxu0 0
    %1371 = vmatmul.mubr.bf16.gmra.mxu0 %v1312
    %v1372 = vpop.f32.mrf.mxu0
    %v1373 = vadd.f32 %v1275, %v1372
    %v1374 = vpop.f32.mrf.mxu0
    %v1375 = vpop.f32.mrf.mxu0
    %v1376 = vadd.f32 %v1279, %v1375
    %v1377 = vpop.f32.mrf.mxu0
    %1378 = vdwg.mxu0
    %v1379 = vmax.f32 %v1349, 0.0
    %v1380 = vmax.f32 %v1352, 0.0
    %v1381 = vmax.f32 %v1357, 0.0
    %v1382 = vmax.f32 %v1360, 0.0
    %v1383 = vmax.f32 %v1365, 0.0
    %v1384 = vmax.f32 %v1368, 0.0
    %v1385 = vmax.f32 %v1373, 0.0
    %v1386 = vmax.f32 %v1376, 0.0
    %1387 = vset.pattern.permute.xlu0 4
    %1388 = vperm.xlu0 %1387, %v623
    %v1389 = vpop.permute.xlu0 %1388
    %1391 = vset.pattern.permute.xlu0 4
    %1392 = vperm.xlu0 %1391, %v624
    %v1393 = vpop.permute.xlu0 %1392
    %1395 = vset.pattern.permute.xlu0 4
    %1396 = vperm.xlu0 %1395, %v625
    %v1397 = vpop.permute.xlu0 %1396
    %1399 = vset.pattern.permute.xlu0 4
    %1400 = vperm.xlu0 %1399, %v626
    %v1401 = vpop.permute.xlu0 %1400
    %1403 = vset.pattern.permute.xlu0 4
    %1404 = vperm.xlu0 %1403, %v627
    %v1405 = vpop.permute.xlu0 %1404
    %1407 = vset.pattern.permute.xlu0 4
    %1408 = vperm.xlu0 %1407, %v628
    %v1409 = vpop.permute.xlu0 %1408
    %1411 = vset.pattern.permute.xlu0 4
    %1412 = vperm.xlu0 %1411, %v629
    %v1413 = vpop.permute.xlu0 %1412
    %1415 = vset.pattern.permute.xlu0 4
    %1416 = vperm.xlu0 %1415, %v630
    %v1417 = vpop.permute.xlu0 %1416
    %v1419 = vmul.f32 %v1379, %v1389
    %v1420 = vmul.f32 %v1380, %v1393
    %v1421 = vmul.f32 %v1381, %v1397
    %v1422 = vmul.f32 %v1382, %v1401
    %v1423 = vmul.f32 %v1383, %v1405
    %v1424 = vmul.f32 %v1384, %v1409
    %v1425 = vmul.f32 %v1385, %v1413
    %v1426 = vmul.f32 %v1386, %v1417
    %v1427 = vadd.f32 %v1419, %v1420
    %v1428 = vadd.f32 %v1427, %v1421
    %v1429 = vadd.f32 %v1428, %v1422
    %v1430 = vadd.f32 %v1429, %v1423
    %v1431 = vadd.f32 %v1430, %v1424
    %v1432 = vadd.f32 %v1431, %v1425
    %v1433 = vadd.f32 %v1432, %v1426
    %v1434 = vrot.slane %v1433, 4
    %v1435 = vadd.f32 %v1433, %v1434
    %v1436 = vrot.slane %v1435, 2
    %v1437 = vadd.f32 %v1435, %v1436
    %v1438 = vrot.slane %v1437, 1
    %v1439 = vadd.f32 %v1437, %v1438
    %s1440 = sld [smem:[#allocation2]]
    %v1441 = vstv %s1440
    %v1442 = vadd.f32 %v1439, %v1441
    %1443 = vst [vmem:[#allocation6] sm:$0x1] %v1442
    // Predicated region
    $region34: #{tpu_custom_call.1} parent=1 // pred_check
      _
    $region35: #{tpu_custom_call.1} parent=1 // pred_check_branch
      %1445 = sbr.rel (0) target = $region37
    $region36: #{tpu_custom_call.1} parent=1 // pred_region
      %s1447 = ssub.s32 16, 16
      %1448 = vsyncadd [#allocation5], %s1447
      %s1450 = sshll.u32 [#allocation6], 4
      %s1451 = int_to_ptr.vmem [resolvable:$true] %s1450
      %1453 = dma.vmem_to_hbm [thread:$0]  %s1451, 16, %s7, [#allocation5]
    $region37: #{tpu_custom_call.1} parent=1 // pred_fallthru
      _
    // Predicated region
    $region38: #{tpu_custom_call.1} parent=1 // pred_check
      _
    $region39: #{tpu_custom_call.1} parent=1 // pred_check_branch
      %1455 = sbr.rel (0) target = $region41
    $region40: #{tpu_custom_call.1} parent=1 // pred_region
      %1456 = dma.done [#allocation5], 16
    $region41: #{tpu_custom_call.1} parent=1 // pred_fallthru
      _
    %1457 = vsyncpa [#allocation4], 1
    %1458 = vsyncpa [#allocation5], 1

</llo_original>
